<compile_context>
chip_gen: v5e
topology: v5e:2x2
jax: 0.10.0
libtpu: 0.0.40
codegen_flags: <defaults>
</compile_context>

<pallas_src>
import functools

import jax
import jax.numpy as jnp
from jax.experimental import pallas as pl
from jax.experimental.pallas import tpu as pltpu


# ----------------------------- small utilities / probes -----------------------------

def _round_up(x, m):
    return ((x + m - 1) // m) * m


def _try_run(fn):
    try:
        fn()
        return True
    except Exception:
        return False


def _probe_single_buffer():
    """True iff this jax/Mosaic build accepts pipeline_mode=pl.Buffered(1) (single buffering)
    on a BlockSpec -- used so constant-index (resident) inputs are not double-buffered."""
    def body(x_ref, o_ref):
        o_ref[...] = x_ref[...] + 1.0

    def run():
        f = pl.pallas_call(
            body,
            out_shape=jax.ShapeDtypeStruct((8, 128), jnp.float32),
            grid=(2,),
            in_specs=[pl.BlockSpec((8, 128), lambda i: (0, 0),
                                   pipeline_mode=pl.Buffered(1))],
            out_specs=pl.BlockSpec((8, 128), lambda i: (0, 0)),
        )
        jax.block_until_ready(f(jnp.zeros((8, 128), jnp.float32)))

    return _try_run(run)


def _probe_bf16_tanh():
    """True iff a bf16 tanh lowers inside a Pallas TPU kernel on this chip."""
    def body(x_ref, o_ref):
        o_ref[...] = jnp.tanh(x_ref[...])

    def run():
        f = pl.pallas_call(body, out_shape=jax.ShapeDtypeStruct((8, 128), jnp.bfloat16))
        jax.block_until_ready(f(jnp.zeros((8, 128), jnp.bfloat16)))

    return _try_run(run)


def _pick_ew_dtype():
    """bf16 for the big (B,S,H) tanh only on chips with a bf16 VPU/EUP path (v6e/v7x);
    f32 on v5e and older (no bf16 element-wise units)."""
    try:
        kind = jax.devices()[0].device_kind.lower()
    except Exception:
        return jnp.float32
    if any(v in kind for v in ("v2", "v3", "v4", "v5")):
        return jnp.float32
    return jnp.bfloat16 if _probe_bf16_tanh() else jnp.float32


def _pick_vmem_limit(fraction=0.75, fallback=48 * 1024 * 1024):
    """Scoped-VMEM budget: a fraction of physical VMEM, leaving headroom for compiler scratch
    and the pipelined xt/out buffers (v5e/v6e -> ~96 MiB, v7x -> ~48 MiB)."""
    try:
        cap = int(pltpu.get_tpu_info().vmem_capacity_bytes)
        return max(32 * 1024 * 1024, int(cap * fraction))
    except Exception:
        return fallback


_SINGLE_BUFFER_OK = _probe_single_buffer()
_EW_DTYPE = _pick_ew_dtype()
_VMEM_LIMIT = _pick_vmem_limit()


def _spec(shape, index_map, single_buffer=False):
    """BlockSpec; constant-index (resident) operands are single-buffered when supported."""
    if single_buffer and _SINGLE_BUFFER_OK:
        return pl.BlockSpec(shape, index_map, pipeline_mode=pl.Buffered(1))
    return pl.BlockSpec(shape, index_map)


# ------------------------------- Pallas kernels -------------------------------

def _precompute_kernel(x_ref, w_att_ref, b_att_ref, wc_ref, bc_ref, att_ref, patt_ref):
    """Row tile of the time-invariant precompute:
         att   = relu(att_feats @ W_att + b_att)     (stored bf16)
         p_att = att @ W_ctx2att + b_ctx2att         (stored bf16)"""
    f32, bf16 = jnp.float32, jnp.bfloat16
    x = x_ref[...].astype(bf16)                                                   # (TM, F)
    att = jax.nn.relu(jnp.dot(x, w_att_ref[...], preferred_element_type=f32)
                      + b_att_ref[...])                                           # (TM, D) f32
    att_ref[...] = att.astype(bf16)
    patt = jnp.dot(att.astype(bf16), wc_ref[...], preferred_element_type=f32) + bc_ref[...]
    patt_ref[...] = patt.astype(bf16)                                             # (TM, H)


def _decode_kernel(xt_ref, att_ref, patt_ref, fc_ref,
                   wg_ref, bg_ref, wsl_ref, bsl_ref, wse_ref, bse_ref,
                   whl_ref, bhl_ref, whe_ref, bhe_ref, wa_ref, ba_ref,
                   wat_ref, bat_ref,
                   oh_ref, hx_ref, cx_ref, *, ew_dtype):
    """One fused sentinel-LSTM + AdaAttention step for a whole batch block.
    grid = (batch_block ["parallel"], t ["arbitrary"]); hx/cx carried in VMEM scratch."""
    f32, bf16 = jnp.float32, jnp.bfloat16
    t = pl.program_id(1)
    Bb, D = hx_ref.shape

    @pl.when(t == 0)
    def _():                                    # init_hidden for this batch block
        hx_ref[...] = jnp.zeros_like(hx_ref)
        cx_ref[...] = jnp.zeros_like(cx_ref)

    xt = xt_ref[0]                              # (Bb, E)  relu(embed(word)) for this timestep
    fc = fc_ref[...]                            # (Bb, D)  mean image feature (resident)
    hx = hx_ref[...]
    cx = cx_ref[...]

    # -------- sentinel LSTM: single fused [xt | hx | fc] gate GEMM (bf16 MXU, f32 acc) --------
    z = jnp.concatenate([xt, hx, fc], axis=-1).astype(bf16)                       # (Bb, E+2D)
    gates = jnp.dot(z, wg_ref[...], preferred_element_type=f32) + bg_ref[...]     # (Bb, 6D)

    in_g = jax.nn.sigmoid(gates[:, 0 * D:1 * D])
    f_g = jax.nn.sigmoid(gates[:, 1 * D:2 * D])
    o_g = jax.nn.sigmoid(gates[:, 2 * D:3 * D])
    s_g = jax.nn.sigmoid(gates[:, 3 * D:4 * D])
    cell = jnp.maximum(gates[:, 4 * D:5 * D], gates[:, 5 * D:6 * D])

    # NOTE: exactly matches the provided PyTorch lstm.forward: the POST-tanh value
    #       cy = tanh(f*cx + i*cell) is what gets carried as the cell state.
    cy = jnp.tanh(f_g * cx + in_g * cell)
    sentinel = s_g * cy
    hy = o_g * cy                               # dropout == identity (eval mode)
    hx_ref[...] = hy
    cx_ref[...] = cy

    # ---------------- AdaAttention ----------------
    sent_lin = jax.nn.relu(jnp.dot(sentinel.astype(bf16), wsl_ref[...],
                                   preferred_element_type=f32) + bsl_ref[...])    # (Bb, E)
    sent_emb = jnp.dot(sent_lin.astype(bf16), wse_ref[...],
                       preferred_element_type=f32) + bse_ref[...]                 # (Bb, H)
    h_lin = jnp.tanh(jnp.dot(hy.astype(bf16), whl_ref[...],
                             preferred_element_type=f32) + bhl_ref[...])          # (Bb, E)
    h_emb = jnp.dot(h_lin.astype(bf16), whe_ref[...],
                    preferred_element_type=f32) + bhe_ref[...]                    # (Bb, H)

    hA0 = jnp.tanh(sent_emb + h_emb)                                              # (Bb, H)
    # Big (Bb,S,H) tanh: bf16 on v6e/v7x (bf16 EUP, probed), f32 on v5e.
    hA = jnp.tanh(patt_ref[...].astype(ew_dtype)
                  + h_emb[:, None, :].astype(ew_dtype))                           # (Bb, S, H)

    # Alpha scores: VPU multiply + lane reduce.
    # NOTE: the pure-MXU variant (hA.reshape(B*S,H) @ wa) needs a (B*S,1)->(B,S) minor-dim
    #       relayout afterwards, which lands back on the XLU and risks an unsupported Mosaic
    #       reshape -- kept on the VPU/XLU path on purpose.
    wa = wa_ref[...]                                                              # (1, H)
    ba = ba_ref[...]                                                              # (1, 1)
    a0 = jnp.sum(hA0 * wa, axis=-1, keepdims=True) + ba                           # (Bb, 1)
    a_img = jnp.sum(hA.astype(f32) * wa[None], axis=-1) + ba                      # (Bb, S)

    # softmax over the S + 1 slots (slot 0 = sentinel); approx reciprocal -> free EUP slot.
    m = jnp.maximum(jnp.max(a_img, axis=-1, keepdims=True), a0)                   # (Bb, 1)
    e0 = jnp.exp(a0 - m)
    e_img = jnp.exp(a_img - m)
    inv = pl.reciprocal(e0 + jnp.sum(e_img, axis=-1, keepdims=True), approx=True)
    alpha0 = e0 * inv                                                             # (Bb, 1)
    alpha_img = e_img * inv                                                       # (Bb, S)

    # cHat = alpha @ [sentinel_linear ; att]: image part as a bf16 batched MXU matmul.
    # (On v5e, if this M=1 MXU push is critical-path, the VPU alternative is
    #  (alpha_img[:, :, None] * att).sum(axis=1).)
    ctx = jnp.einsum('bis,bsd->bid', alpha_img[:, None, :].astype(bf16),
                     att_ref[...], preferred_element_type=f32)[:, 0, :]           # (Bb, D)
    cHat = alpha0 * sent_lin + ctx                                                # (Bb, D) (E == D)

    atten_out = cHat + h_lin
    out_h = jnp.tanh(jnp.dot(atten_out.astype(bf16), wat_ref[...],
                             preferred_element_type=f32) + bat_ref[...])          # (Bb, D)
    oh_ref[0] = out_h.astype(oh_ref.dtype)


def _logit_kernel(oh_ref, wl_ref, bl_ref, logp_ref):
    """Row tile of logits = out_h @ W_logit + b followed by log_softmax over the vocab."""
    f32 = jnp.float32
    logits = jnp.dot(oh_ref[...], wl_ref[...], preferred_element_type=f32) + bl_ref[...]
    lmax = jnp.max(logits, axis=-1, keepdims=True)
    lse = lmax + jnp.log(jnp.sum(jnp.exp(logits - lmax), axis=-1, keepdims=True))
    logp_ref[...] = logits - lse


# ------------------------------- wrappers -------------------------------

def precompute_att(att_feats, params, *, row_tile=512):
    """att_embed + ctx2att for all (B*S) rows, row-tiled and pipelined; bf16 outputs."""
    B, S, F = att_feats.shape
    D = params["att_w"].shape[1]
    H = params["wc"].shape[1]
    M = B * S
    tm = min(row_tile, _round_up(M, 8))
    mp = _round_up(M, tm)
    x = att_feats.reshape(M, F)
    if mp != M:
        x = jnp.pad(x, ((0, mp - M), (0, 0)))

    att_flat, patt_flat = pl.pallas_call(
        _precompute_kernel,
        out_shape=(jax.ShapeDtypeStruct((mp, D), jnp.bfloat16),
                   jax.ShapeDtypeStruct((mp, H), jnp.bfloat16)),
        grid=(mp // tm,),
        in_specs=[_spec((tm, F), lambda i: (i, 0)),
                  _spec((F, D), lambda i: (0, 0), single_buffer=True),
                  _spec((1, D), lambda i: (0, 0), single_buffer=True),
                  _spec((D, H), lambda i: (0, 0), single_buffer=True),
                  _spec((1, H), lambda i: (0, 0), single_buffer=True)],
        out_specs=(pl.BlockSpec((tm, D), lambda i: (i, 0)),
                   pl.BlockSpec((tm, H), lambda i: (i, 0))),
        compiler_params=pltpu.CompilerParams(
            dimension_semantics=("parallel",), vmem_limit_bytes=_VMEM_LIMIT),
    )(x, params["att_w"], params["att_b"], params["wc"], params["bc"])

    att = att_flat[:M].reshape(B, S, D)
    p_att = patt_flat[:M].reshape(B, S, H)
    fc = jnp.mean(att.astype(jnp.float32), axis=1)      # tiny; plain XLA follow-up
    return att, p_att, fc


_DECODE_WEIGHT_KEYS = ("w_gates", "b_gates", "wsl", "bsl", "wse", "bse",
                       "whl", "bhl", "whe", "bhe", "wa", "ba", "wat", "bat")


def ada_att_decode(xt_all, att, p_att, fc, params, *, num_batch_blocks=1):
    """Fused T-step recurrent decode -> out_h (T-1, B, D) bf16.  xt_all: (T-1, B, E).
    Set num_batch_blocks=2 on v7x (2 TensorCores); the per-core batch block must then be a
    multiple of 8 (or equal to B)."""
    n, B, E = xt_all.shape
    _, S, D = att.shape
    H = p_att.shape[-1]
    assert B % num_batch_blocks == 0
    Bb = B // num_batch_blocks
    weights = [params[k] for k in _DECODE_WEIGHT_KEYS]

    in_specs = (
        [_spec((1, Bb, E), lambda bi, t: (t, bi, 0))]                              # per-step xt
        + [_spec((Bb, S, D), lambda bi, t: (bi, 0, 0), single_buffer=True),        # att   (bf16)
           _spec((Bb, S, H), lambda bi, t: (bi, 0, 0), single_buffer=True),        # p_att (bf16)
           _spec((Bb, D), lambda bi, t: (bi, 0), single_buffer=True)]              # fc
        + [_spec(w.shape, (lambda bi, t, z=(0,) * w.ndim: z), single_buffer=True)
           for w in weights]                                                       # resident weights
    )

    return pl.pallas_call(
        functools.partial(_decode_kernel, ew_dtype=_EW_DTYPE),
        out_shape=jax.ShapeDtypeStruct((n, B, D), jnp.bfloat16),
        grid=(num_batch_blocks, n),            # (batch blocks ["parallel"], time ["arbitrary"])
        in_specs=in_specs,
        out_specs=pl.BlockSpec((1, Bb, D), lambda bi, t: (t, bi, 0)),
        scratch_shapes=[pltpu.VMEM((Bb, D), jnp.float32),    # hx carry
                        pltpu.VMEM((Bb, D), jnp.float32)],   # cx carry
        compiler_params=pltpu.CompilerParams(
            dimension_semantics=("parallel", "arbitrary"),
            vmem_limit_bytes=_VMEM_LIMIT),
    )(xt_all, att, p_att, fc, *weights)


def logit_log_softmax(out_h, wl, bl, *, row_tile=512):
    """(T-1, B, D) -> (T-1, B, V) log-probs as one big M-tiled GEMM + log_softmax.
    TODO(synk): for very large vocab add a V grid axis with an online-LSE accumulator."""
    n, B, D = out_h.shape
    V = wl.shape[-1]
    M = n * B
    tm = min(row_tile, _round_up(M, 8))
    mp = _round_up(M, tm)
    x = out_h.reshape(M, D)
    if mp != M:
        x = jnp.pad(x, ((0, mp - M), (0, 0)))

    logp = pl.pallas_call(
        _logit_kernel,
        out_shape=jax.ShapeDtypeStruct((mp, V), jnp.float32),
        grid=(mp // tm,),
        in_specs=[_spec((tm, D), lambda i: (i, 0)),
                  _spec((D, V), lambda i: (0, 0), single_buffer=True),
                  _spec((1, V), lambda i: (0, 0), single_buffer=True)],
        out_specs=pl.BlockSpec((tm, V), lambda i: (i, 0)),
        compiler_params=pltpu.CompilerParams(
            dimension_semantics=("parallel",), vmem_limit_bytes=_VMEM_LIMIT),
    )(x, wl, bl)
    return logp[:M].reshape(n, B, V)


def _effective_steps(seq):
    """Replicates torch's `for i in range(T-1): if i >= 1 and seq[:, i].sum() == 0: break`
    with a SINGLE host sync (one read of the column sums) instead of one per step."""
    T = int(seq.shape[1])
    cols = jax.device_get(jnp.sum(seq[:, :T - 1], axis=0))
    n = T - 1
    for i in range(1, T - 1):
        if int(cols[i]) == 0:
            n = i
            break
    return n


@functools.partial(jax.jit, static_argnames=("n_steps",))
def _forward_impl(seq, att_feats, params, n_steps):
    att, p_att, fc = precompute_att(att_feats, params)
    # Embedding gather + ReLU for all timesteps at once (one XLA gather, not per-step).
    xt_all = jax.nn.relu(jnp.take(params["embed_table"], seq[:, :n_steps], axis=0))  # (B, n, E)
    xt_all = jnp.transpose(xt_all, (1, 0, 2))                                        # (n, B, E)
    out_h = ada_att_decode(xt_all, att, p_att, fc, params)                           # (n, B, D)
    logp = logit_log_softmax(out_h, params["wl"], params["bl"])                      # (n, B, V)
    return jnp.transpose(logp, (1, 0, 2))                                            # (B, n, V)


def ada_att_model_forward(seq, att_feats, params):
    """Equivalent of AdaAttModel.forward(seq, att_feats) in eval mode."""
    return _forward_impl(seq, att_feats, params, _effective_steps(seq))


# ------------------------------- parameters -------------------------------

def init_params(key, V, E, D, H, F):
    """Matrix weights stored bf16 (MXU input dtype), biases f32.
    For production, pad D(=E), H and V to multiples of 128 (lane-dense gate slices / logp)."""
    assert E == D, "reference model requires input_encoding_size == rnn_size"
    keys = iter(jax.random.split(key, 40))

    def lin(fan_in, shape_w, shape_b, w_dtype=jnp.bfloat16):
        bound = 1.0 / (fan_in ** 0.5)
        w = jax.random.uniform(next(keys), shape_w, jnp.float32, -bound, bound).astype(w_dtype)
        b = jax.random.uniform(next(keys), shape_b, jnp.float32, -bound, bound)
        return w, b

    p = {}
    p["embed_table"] = jax.random.normal(next(keys), (V, E), jnp.float32)
    p["att_w"], p["att_b"] = lin(F, (F, D), (1, D))                      # att_embed
    p["wc"], p["bc"] = lin(D, (D, H), (1, H))                            # ctx2att
    # word2h / h2h / image2h fused: rows [0:E]=word, [E:E+D]=h, [E+D:E+2D]=image.
    # NOTE: when porting real PyTorch weights, b_gates = sum of the three biases.
    p["w_gates"], p["b_gates"] = lin(E + 2 * D, (E + 2 * D, 6 * D), (1, 6 * D))
    p["wsl"], p["bsl"] = lin(D, (D, E), (1, E))                          # sentinel_linear
    p["wse"], p["bse"] = lin(E, (E, H), (1, H))                          # sentinel_embed
    p["whl"], p["bhl"] = lin(D, (D, E), (1, E))                          # ho_linear
    p["whe"], p["bhe"] = lin(E, (E, H), (1, H))                          # ho_embed
    p["wa"], p["ba"] = lin(H, (1, H), (1, 1), w_dtype=jnp.float32)       # alpha_net (row vector)
    p["wat"], p["bat"] = lin(D, (D, D), (1, D))                          # att2h
    p["wl"], p["bl"] = lin(D, (D, V), (1, V))                            # logit
    return p


# ------------------ pure-JAX f32 reference (validation only) ------------------

def forward_reference(seq, att_feats, params, n_steps):
    """Float32 re-implementation of AdaAttModel.forward (eval mode) for validation."""
    f32 = jnp.float32
    g = lambda k: params[k].astype(f32)
    D = params["att_w"].shape[1]
    att = jax.nn.relu(att_feats @ g("att_w") + g("att_b"))               # (B,S,D)
    p_att = att @ g("wc") + g("bc")                                      # (B,S,H)
    fc = jnp.mean(att, axis=1)                                           # (B,D)
    B = att.shape[0]
    hx = jnp.zeros((B, D), f32)
    cx = jnp.zeros((B, D), f32)
    outs = []
    for i in range(n_steps):
        xt = jax.nn.relu(g("embed_table")[seq[:, i]])
        gates = jnp.concatenate([xt, hx, fc], axis=-1) @ g("w_gates") + g("b_gates")
        in_g = jax.nn.sigmoid(gates[:, 0 * D:1 * D])
        f_g = jax.nn.sigmoid(gates[:, 1 * D:2 * D])
        o_g = jax.nn.sigmoid(gates[:, 2 * D:3 * D])
        s_g = jax.nn.sigmoid(gates[:, 3 * D:4 * D])
        cell = jnp.maximum(gates[:, 4 * D:5 * D], gates[:, 5 * D:6 * D])
        cy = jnp.tanh(f_g * cx + in_g * cell)
        sentinel = s_g * cy
        hy = o_g * cy
        sent_lin = jax.nn.relu(sentinel @ g("wsl") + g("bsl"))
        sent_emb = sent_lin @ g("wse") + g("bse")
        h_lin = jnp.tanh(hy @ g("whl") + g("bhl"))
        h_emb = h_lin @ g("whe") + g("bhe")
        hA0 = jnp.tanh(sent_emb + h_emb)
        hA = jnp.tanh(p_att + h_emb[:, None, :])
        a0 = jnp.sum(hA0 * g("wa"), axis=-1, keepdims=True) + g("ba")         # (B,1)
        a_img = jnp.sum(hA * g("wa")[None], axis=-1) + g("ba")                # (B,S)
        alpha = jax.nn.softmax(jnp.concatenate([a0, a_img], axis=1), axis=-1)
        img_all = jnp.concatenate([sent_lin[:, None, :], att], axis=1)        # (B,S+1,D)
        cHat = jnp.einsum('bs,bsd->bd', alpha, img_all)
        out_h = jnp.tanh((cHat + h_lin) @ g("wat") + g("bat"))
        logp = jax.nn.log_softmax(out_h @ g("wl") + g("bl"), axis=-1)
        outs.append(logp)
        hx, cx = hy, cy
    return jnp.stack(outs, axis=1)                                            # (B, n, V)


# ------------------------------- main -------------------------------

if __name__ == "__main__":
    B, S = 2, 16            # batch, att_size (original hardcodes 196)
    V, E, D, H, F = 128, 32, 32, 32, 64   # vocab, enc, rnn (== enc), att_hid, att_feat
    T = 8                   # seq length

    key = jax.random.PRNGKey(0)
    kp, kseq, kfeat = jax.random.split(key, 3)
    params = init_params(kp, V, E, D, H, F)
    seq = jax.random.randint(kseq, (B, T), 1, V, dtype=jnp.int32)     # nonzero tokens
    att_feats = jax.random.normal(kfeat, (B, S, F), jnp.float32)

    out = jax.block_until_ready(ada_att_model_forward(seq, att_feats, params))

    assert out.shape == (B, T - 1, V), out.shape
    # log-softmax rows must exponentiate-sum to 1
    assert bool(jnp.allclose(jnp.sum(jnp.exp(out), axis=-1), 1.0, atol=1e-3))
    # per-logit check against a pure-JAX f32 reference (bf16 MXU inputs / bf16 residency).
    ref = forward_reference(seq, att_feats, params, T - 1)
    max_err = float(jnp.max(jnp.abs(out - ref)))
    assert max_err < 1e-1, max_err
    print("KERNEL_OK")
</pallas_src>

<mosaic_0001>
module attributes {stable_mosaic.version = 11 : i64} {
  func.func @body(%arg0: i32, %arg1: memref<8x128xf32, #tpu.memory_space<vmem>>, %arg2: memref<8x128xf32, #tpu.memory_space<vmem>>) attributes {dimension_semantics = [#tpu.dimension_semantics<arbitrary>], iteration_bounds = array<i64: 2>, scalar_prefetch = 0 : i64, scratch_operands = 0 : i64, tpu.core_type = #tpu.core_type<tc>, window_params = [{pipeline_mode = #tpu.pipeline_mode<synchronous>, transform_indices = @transform_0, window_bounds = array<i64: 8, 128>}, {pipeline_mode = #tpu.pipeline_mode<synchronous>, transform_indices = @transform_1, window_bounds = array<i64: 8, 128>}]} {
    %c0 = arith.constant 0 : index
    %c0_0 = arith.constant 0 : index
    %0 = vector.load %arg1[%c0, %c0_0] : memref<8x128xf32, #tpu.memory_space<vmem>>, vector<8x128xf32>
    %cst = arith.constant 1.000000e+00 : f32
    %1 = vector.broadcast %cst : f32 to vector<8x128xf32>
    %2 = arith.addf %0, %1 : vector<8x128xf32>
    %c0_1 = arith.constant 0 : index
    %c0_2 = arith.constant 0 : index
    %3 = vector.load %arg2[%c0_1, %c0_2] : memref<8x128xf32, #tpu.memory_space<vmem>>, vector<8x128xf32>
    tpu.vector_store %arg2[%c0_1, %c0_2], %2 {strides = array<i32>} : memref<8x128xf32, #tpu.memory_space<vmem>>, vector<8x128xf32>,
    return
  }
  func.func @transform_0(%arg0: i32) -> (i32, i32) {
    %c0_i32 = arith.constant 0 : i32
    %c0_i32_0 = arith.constant 0 : i32
    %c0_i32_1 = arith.constant 0 : i32
    return %c0_i32, %c0_i32_0 : i32, i32
  }
  func.func @transform_1(%arg0: i32) -> (i32, i32) {
    %c0_i32 = arith.constant 0 : i32
    %c0_i32_0 = arith.constant 0 : i32
    %c0_i32_1 = arith.constant 0 : i32
    return %c0_i32, %c0_i32_0 : i32, i32
  }
}

module attributes {stable_mosaic.version = 11 : i64} {
  func.func @body(%arg0: memref<8x128xbf16, #tpu.memory_space<vmem>>, %arg1: memref<8x128xbf16, #tpu.memory_space<vmem>>) attributes {dimension_semantics = [], scalar_prefetch = 0 : i64, scratch_operands = 0 : i64, tpu.core_type = #tpu.core_type<tc>} {
    %c0 = arith.constant 0 : index
    %c0_0 = arith.constant 0 : index
    %0 = vector.load %arg0[%c0, %c0_0] : memref<8x128xbf16, #tpu.memory_space<vmem>>, vector<8x128xbf16>
    %1 = math.tanh %0 : vector<8x128xbf16>
    %c0_1 = arith.constant 0 : index
    %c0_2 = arith.constant 0 : index
    %2 = vector.load %arg1[%c0_1, %c0_2] : memref<8x128xbf16, #tpu.memory_space<vmem>>, vector<8x128xbf16>
    tpu.vector_store %arg1[%c0_1, %c0_2], %1 {strides = array<i32>} : memref<8x128xbf16, #tpu.memory_space<vmem>>, vector<8x128xbf16>,
    return
  }
}

module attributes {stable_mosaic.version = 11 : i64} {
  func.func @_precompute_kernel(%arg0: i32, %arg1: memref<32x64xf32, #tpu.memory_space<vmem>>, %arg2: memref<64x32xbf16, #tpu.memory_space<vmem>>, %arg3: memref<1x32xf32, #tpu.memory_space<vmem>>, %arg4: memref<32x32xbf16, #tpu.memory_space<vmem>>, %arg5: memref<1x32xf32, #tpu.memory_space<vmem>>, %arg6: memref<32x32xbf16, #tpu.memory_space<vmem>>, %arg7: memref<32x32xbf16, #tpu.memory_space<vmem>>) attributes {dimension_semantics = [#tpu.dimension_semantics<parallel>], iteration_bounds = array<i64: 1>, scalar_prefetch = 0 : i64, scratch_operands = 0 : i64, tpu.core_type = #tpu.core_type<tc>, window_params = [{transform_indices = @transform_0, window_bounds = array<i64: 32, 64>}, {pipeline_mode = #tpu.pipeline_mode<synchronous>, transform_indices = @transform_1, window_bounds = array<i64: 64, 32>}, {pipeline_mode = #tpu.pipeline_mode<synchronous>, transform_indices = @transform_2, window_bounds = array<i64: 1, 32>}, {pipeline_mode = #tpu.pipeline_mode<synchronous>, transform_indices = @transform_3, window_bounds = array<i64: 32, 32>}, {pipeline_mode = #tpu.pipeline_mode<synchronous>, transform_indices = @transform_4, window_bounds = array<i64: 1, 32>}, {transform_indices = @transform_5, window_bounds = array<i64: 32, 32>}, {transform_indices = @transform_6, window_bounds = array<i64: 32, 32>}]} {
    %c0 = arith.constant 0 : index
    %c0_0 = arith.constant 0 : index
    %0 = vector.load %arg1[%c0, %c0_0] : memref<32x64xf32, #tpu.memory_space<vmem>>, vector<32x64xf32>
    %1 = arith.truncf %0 : vector<32x64xf32> to vector<32x64xbf16>
    %c0_1 = arith.constant 0 : index
    %c0_2 = arith.constant 0 : index
    %2 = vector.load %arg2[%c0_1, %c0_2] : memref<64x32xbf16, #tpu.memory_space<vmem>>, vector<64x32xbf16>
    %cst = arith.constant dense<0.000000e+00> : vector<32x32xf32>
    %3 = tpu.matmul %1, %2, %cst {dimension_numbers = #tpu.dot_dimension_numbers<[1], [0], [0], [1], [0, 0, 1, 1], [], []>} : vector<32x64xbf16>, vector<64x32xbf16>, vector<32x32xf32> -> vector<32x32xf32>
    %c0_3 = arith.constant 0 : index
    %c0_4 = arith.constant 0 : index
    %4 = vector.load %arg3[%c0_3, %c0_4] : memref<1x32xf32, #tpu.memory_space<vmem>>, vector<1x32xf32>
    %5 = vector.broadcast %4 : vector<1x32xf32> to vector<32x32xf32>
    %6 = arith.addf %3, %5 : vector<32x32xf32>
    %cst_5 = arith.constant 0.000000e+00 : f32
    %7 = vector.broadcast %cst_5 : f32 to vector<32x32xf32>
    %8 = arith.maximumf %6, %7 : vector<32x32xf32>
    %9 = arith.truncf %8 : vector<32x32xf32> to vector<32x32xbf16>
    %c0_6 = arith.constant 0 : index
    %c0_7 = arith.constant 0 : index
    %10 = vector.load %arg6[%c0_6, %c0_7] : memref<32x32xbf16, #tpu.memory_space<vmem>>, vector<32x32xbf16>
    tpu.vector_store %arg6[%c0_6, %c0_7], %9 {strides = array<i32>} : memref<32x32xbf16, #tpu.memory_space<vmem>>, vector<32x32xbf16>,
    %11 = arith.truncf %8 : vector<32x32xf32> to vector<32x32xbf16>
    %c0_8 = arith.constant 0 : index
    %c0_9 = arith.constant 0 : index
    %12 = vector.load %arg4[%c0_8, %c0_9] : memref<32x32xbf16, #tpu.memory_space<vmem>>, vector<32x32xbf16>
    %cst_10 = arith.constant dense<0.000000e+00> : vector<32x32xf32>
    %13 = tpu.matmul %11, %12, %cst_10 {dimension_numbers = #tpu.dot_dimension_numbers<[1], [0], [0], [1], [0, 0, 1, 1], [], []>} : vector<32x32xbf16>, vector<32x32xbf16>, vector<32x32xf32> -> vector<32x32xf32>
    %c0_11 = arith.constant 0 : index
    %c0_12 = arith.constant 0 : index
    %14 = vector.load %arg5[%c0_11, %c0_12] : memref<1x32xf32, #tpu.memory_space<vmem>>, vector<1x32xf32>
    %15 = vector.broadcast %14 : vector<1x32xf32> to vector<32x32xf32>
    %16 = arith.addf %13, %15 : vector<32x32xf32>
    %17 = arith.truncf %16 : vector<32x32xf32> to vector<32x32xbf16>
    %c0_13 = arith.constant 0 : index
    %c0_14 = arith.constant 0 : index
    %18 = vector.load %arg7[%c0_13, %c0_14] : memref<32x32xbf16, #tpu.memory_space<vmem>>, vector<32x32xbf16>
    tpu.vector_store %arg7[%c0_13, %c0_14], %17 {strides = array<i32>} : memref<32x32xbf16, #tpu.memory_space<vmem>>, vector<32x32xbf16>,
    return
  }
  func.func @transform_0(%arg0: i32) -> (i32, i32) {
    %c0_i32 = arith.constant 0 : i32
    %c0_i32_0 = arith.constant 0 : i32
    return %arg0, %c0_i32 : i32, i32
  }
  func.func @transform_1(%arg0: i32) -> (i32, i32) {
    %c0_i32 = arith.constant 0 : i32
    %c0_i32_0 = arith.constant 0 : i32
    %c0_i32_1 = arith.constant 0 : i32
    return %c0_i32, %c0_i32_0 : i32, i32
  }
  func.func @transform_2(%arg0: i32) -> (i32, i32) {
    %c0_i32 = arith.constant 0 : i32
    %c0_i32_0 = arith.constant 0 : i32
    %c0_i32_1 = arith.constant 0 : i32
    return %c0_i32, %c0_i32_0 : i32, i32
  }
  func.func @transform_3(%arg0: i32) -> (i32, i32) {
    %c0_i32 = arith.constant 0 : i32
    %c0_i32_0 = arith.constant 0 : i32
    %c0_i32_1 = arith.constant 0 : i32
    return %c0_i32, %c0_i32_0 : i32, i32
  }
  func.func @transform_4(%arg0: i32) -> (i32, i32) {
    %c0_i32 = arith.constant 0 : i32
    %c0_i32_0 = arith.constant 0 : i32
    %c0_i32_1 = arith.constant 0 : i32
    return %c0_i32, %c0_i32_0 : i32, i32
  }
  func.func @transform_5(%arg0: i32) -> (i32, i32) {
    %c0_i32 = arith.constant 0 : i32
    %c0_i32_0 = arith.constant 0 : i32
    return %arg0, %c0_i32 : i32, i32
  }
  func.func @transform_6(%arg0: i32) -> (i32, i32) {
    %c0_i32 = arith.constant 0 : i32
    %c0_i32_0 = arith.constant 0 : i32
    return %arg0, %c0_i32 : i32, i32
  }
}

module attributes {stable_mosaic.version = 11 : i64} {
  func.func @_decode_kernel(%arg0: i32, %arg1: i32, %arg2: memref<1x2x32xf32, #tpu.memory_space<vmem>>, %arg3: memref<2x16x32xbf16, #tpu.memory_space<vmem>>, %arg4: memref<2x16x32xbf16, #tpu.memory_space<vmem>>, %arg5: memref<2x32xf32, #tpu.memory_space<vmem>>, %arg6: memref<96x192xbf16, #tpu.memory_space<vmem>>, %arg7: memref<1x192xf32, #tpu.memory_space<vmem>>, %arg8: memref<32x32xbf16, #tpu.memory_space<vmem>>, %arg9: memref<1x32xf32, #tpu.memory_space<vmem>>, %arg10: memref<32x32xbf16, #tpu.memory_space<vmem>>, %arg11: memref<1x32xf32, #tpu.memory_space<vmem>>, %arg12: memref<32x32xbf16, #tpu.memory_space<vmem>>, %arg13: memref<1x32xf32, #tpu.memory_space<vmem>>, %arg14: memref<32x32xbf16, #tpu.memory_space<vmem>>, %arg15: memref<1x32xf32, #tpu.memory_space<vmem>>, %arg16: memref<1x32xf32, #tpu.memory_space<vmem>>, %arg17: memref<1x1xf32, #tpu.memory_space<vmem>>, %arg18: memref<32x32xbf16, #tpu.memory_space<vmem>>, %arg19: memref<1x32xf32, #tpu.memory_space<vmem>>, %arg20: memref<1x2x32xbf16, #tpu.memory_space<vmem>>, %arg21: memref<2x32xf32, #tpu.memory_space<vmem>>, %arg22: memref<2x32xf32, #tpu.memory_space<vmem>>) attributes {dimension_semantics = [#tpu.dimension_semantics<parallel>, #tpu.dimension_semantics<arbitrary>], iteration_bounds = array<i64: 1, 7>, scalar_prefetch = 0 : i64, scratch_operands = 2 : i64, tpu.core_type = #tpu.core_type<tc>, window_params = [{transform_indices = @transform_0, window_bounds = array<i64: 1, 2, 32>}, {transform_indices = @transform_1, window_bounds = array<i64: 2, 16, 32>}, {transform_indices = @transform_2, window_bounds = array<i64: 2, 16, 32>}, {transform_indices = @transform_3, window_bounds = array<i64: 2, 32>}, {pipeline_mode = #tpu.pipeline_mode<synchronous>, transform_indices = @transform_4, window_bounds = array<i64: 96, 192>}, {pipeline_mode = #tpu.pipeline_mode<synchronous>, transform_indices = @transform_5, window_bounds = array<i64: 1, 192>}, {pipeline_mode = #tpu.pipeline_mode<synchronous>, transform_indices = @transform_6, window_bounds = array<i64: 32, 32>}, {pipeline_mode = #tpu.pipeline_mode<synchronous>, transform_indices = @transform_7, window_bounds = array<i64: 1, 32>}, {pipeline_mode = #tpu.pipeline_mode<synchronous>, transform_indices = @transform_8, window_bounds = array<i64: 32, 32>}, {pipeline_mode = #tpu.pipeline_mode<synchronous>, transform_indices = @transform_9, window_bounds = array<i64: 1, 32>}, {pipeline_mode = #tpu.pipeline_mode<synchronous>, transform_indices = @transform_10, window_bounds = array<i64: 32, 32>}, {pipeline_mode = #tpu.pipeline_mode<synchronous>, transform_indices = @transform_11, window_bounds = array<i64: 1, 32>}, {pipeline_mode = #tpu.pipeline_mode<synchronous>, transform_indices = @transform_12, window_bounds = array<i64: 32, 32>}, {pipeline_mode = #tpu.pipeline_mode<synchronous>, transform_indices = @transform_13, window_bounds = array<i64: 1, 32>}, {pipeline_mode = #tpu.pipeline_mode<synchronous>, transform_indices = @transform_14, window_bounds = array<i64: 1, 32>}, {pipeline_mode = #tpu.pipeline_mode<synchronous>, transform_indices = @transform_15, window_bounds = array<i64: 1, 1>}, {pipeline_mode = #tpu.pipeline_mode<synchronous>, transform_indices = @transform_16, window_bounds = array<i64: 32, 32>}, {pipeline_mode = #tpu.pipeline_mode<synchronous>, transform_indices = @transform_17, window_bounds = array<i64: 1, 32>}, {transform_indices = @transform_18, window_bounds = array<i64: 1, 2, 32>}]} {
    %c0_i32 = arith.constant 0 : i32
    %0 = arith.cmpi eq, %arg1, %c0_i32 : i32
    %1 = arith.extui %0 : i1 to i32
    %c0_i32_0 = arith.constant 0 : i32
    %2 = arith.cmpi ne, %1, %c0_i32_0 : i32
    scf.if %2 {
      %cst_65 = arith.constant 0.000000e+00 : f32
      %134 = vector.broadcast %cst_65 : f32 to vector<2x32xf32>
      %c0_66 = arith.constant 0 : index
      %c0_67 = arith.constant 0 : index
      %135 = vector.load %arg21[%c0_66, %c0_67] : memref<2x32xf32, #tpu.memory_space<vmem>>, vector<2x32xf32>
      tpu.vector_store %arg21[%c0_66, %c0_67], %134 {strides = array<i32>} : memref<2x32xf32, #tpu.memory_space<vmem>>, vector<2x32xf32>,
      %cst_68 = arith.constant 0.000000e+00 : f32
      %136 = vector.broadcast %cst_68 : f32 to vector<2x32xf32>
      %c0_69 = arith.constant 0 : index
      %c0_70 = arith.constant 0 : index
      %137 = vector.load %arg22[%c0_69, %c0_70] : memref<2x32xf32, #tpu.memory_space<vmem>>, vector<2x32xf32>
      tpu.vector_store %arg22[%c0_69, %c0_70], %136 {strides = array<i32>} : memref<2x32xf32, #tpu.memory_space<vmem>>, vector<2x32xf32>,
    } else {
    }
    %c0 = arith.constant 0 : index
    %c0_1 = arith.constant 0 : index
    %c0_2 = arith.constant 0 : index
    %3 = vector.load %arg2[%c0, %c0_1, %c0_2] : memref<1x2x32xf32, #tpu.memory_space<vmem>>, vector<1x2x32xf32>
    %4 = vector.shape_cast %3 : vector<1x2x32xf32> to vector<2x32xf32>
    %c0_3 = arith.constant 0 : index
    %c0_4 = arith.constant 0 : index
    %5 = vector.load %arg5[%c0_3, %c0_4] : memref<2x32xf32, #tpu.memory_space<vmem>>, vector<2x32xf32>
    %c0_5 = arith.constant 0 : index
    %c0_6 = arith.constant 0 : index
    %6 = vector.load %arg21[%c0_5, %c0_6] : memref<2x32xf32, #tpu.memory_space<vmem>>, vector<2x32xf32>
    %c0_7 = arith.constant 0 : index
    %c0_8 = arith.constant 0 : index
    %7 = vector.load %arg22[%c0_7, %c0_8] : memref<2x32xf32, #tpu.memory_space<vmem>>, vector<2x32xf32>
    %8 = tpu.concatenate %4, %6, %5 in 1 : vector<2x32xf32>, vector<2x32xf32>, vector<2x32xf32> -> vector<2x96xf32>
    %9 = arith.truncf %8 : vector<2x96xf32> to vector<2x96xbf16>
    %c0_9 = arith.constant 0 : index
    %c0_10 = arith.constant 0 : index
    %10 = vector.load %arg6[%c0_9, %c0_10] : memref<96x192xbf16, #tpu.memory_space<vmem>>, vector<96x192xbf16>
    %cst = arith.constant dense<0.000000e+00> : vector<2x192xf32>
    %11 = tpu.matmul %9, %10, %cst {dimension_numbers = #tpu.dot_dimension_numbers<[1], [0], [0], [1], [0, 0, 1, 1], [], []>} : vector<2x96xbf16>, vector<96x192xbf16>, vector<2x192xf32> -> vector<2x192xf32>
    %c0_11 = arith.constant 0 : index
    %c0_12 = arith.constant 0 : index
    %12 = vector.load %arg7[%c0_11, %c0_12] : memref<1x192xf32, #tpu.memory_space<vmem>>, vector<1x192xf32>
    %13 = vector.broadcast %12 : vector<1x192xf32> to vector<2x192xf32>
    %14 = arith.addf %11, %13 : vector<2x192xf32>
    %15 = vector.extract_strided_slice %14 {offsets = [0, 0], sizes = [2, 32], strides = [1, 1]} : vector<2x192xf32> to vector<2x32xf32>
    %16 = arith.negf %15 : vector<2x32xf32>
    %17 = math.exp %16 : vector<2x32xf32>
    %cst_13 = arith.constant 1.000000e+00 : f32
    %18 = vector.broadcast %cst_13 : f32 to vector<2x32xf32>
    %19 = arith.addf %18, %17 : vector<2x32xf32>
    %20 = arith.divf %18, %19 : vector<2x32xf32>
    %21 = vector.extract_strided_slice %14 {offsets = [0, 32], sizes = [2, 32], strides = [1, 1]} : vector<2x192xf32> to vector<2x32xf32>
    %22 = arith.negf %21 : vector<2x32xf32>
    %23 = math.exp %22 : vector<2x32xf32>
    %cst_14 = arith.constant 1.000000e+00 : f32
    %24 = vector.broadcast %cst_14 : f32 to vector<2x32xf32>
    %25 = arith.addf %24, %23 : vector<2x32xf32>
    %26 = arith.divf %24, %25 : vector<2x32xf32>
    %27 = vector.extract_strided_slice %14 {offsets = [0, 64], sizes = [2, 32], strides = [1, 1]} : vector<2x192xf32> to vector<2x32xf32>
    %28 = arith.negf %27 : vector<2x32xf32>
    %29 = math.exp %28 : vector<2x32xf32>
    %cst_15 = arith.constant 1.000000e+00 : f32
    %30 = vector.broadcast %cst_15 : f32 to vector<2x32xf32>
    %31 = arith.addf %30, %29 : vector<2x32xf32>
    %32 = arith.divf %30, %31 : vector<2x32xf32>
    %33 = vector.extract_strided_slice %14 {offsets = [0, 96], sizes = [2, 32], strides = [1, 1]} : vector<2x192xf32> to vector<2x32xf32>
    %34 = arith.negf %33 : vector<2x32xf32>
    %35 = math.exp %34 : vector<2x32xf32>
    %cst_16 = arith.constant 1.000000e+00 : f32
    %36 = vector.broadcast %cst_16 : f32 to vector<2x32xf32>
    %37 = arith.addf %36, %35 : vector<2x32xf32>
    %38 = arith.divf %36, %37 : vector<2x32xf32>
    %39 = vector.extract_strided_slice %14 {offsets = [0, 128], sizes = [2, 32], strides = [1, 1]} : vector<2x192xf32> to vector<2x32xf32>
    %40 = vector.extract_strided_slice %14 {offsets = [0, 160], sizes = [2, 32], strides = [1, 1]} : vector<2x192xf32> to vector<2x32xf32>
    %41 = arith.maximumf %39, %40 : vector<2x32xf32>
    %42 = arith.mulf %26, %7 : vector<2x32xf32>
    %43 = arith.mulf %20, %41 : vector<2x32xf32>
    %44 = arith.addf %42, %43 : vector<2x32xf32>
    %45 = math.tanh %44 : vector<2x32xf32>
    %46 = arith.mulf %38, %45 : vector<2x32xf32>
    %47 = arith.mulf %32, %45 : vector<2x32xf32>
    %c0_17 = arith.constant 0 : index
    %c0_18 = arith.constant 0 : index
    %48 = vector.load %arg21[%c0_17, %c0_18] : memref<2x32xf32, #tpu.memory_space<vmem>>, vector<2x32xf32>
    tpu.vector_store %arg21[%c0_17, %c0_18], %47 {strides = array<i32>} : memref<2x32xf32, #tpu.memory_space<vmem>>, vector<2x32xf32>,
    %c0_19 = arith.constant 0 : index
    %c0_20 = arith.constant 0 : index
    %49 = vector.load %arg22[%c0_19, %c0_20] : memref<2x32xf32, #tpu.memory_space<vmem>>, vector<2x32xf32>
    tpu.vector_store %arg22[%c0_19, %c0_20], %45 {strides = array<i32>} : memref<2x32xf32, #tpu.memory_space<vmem>>, vector<2x32xf32>,
    %50 = arith.truncf %46 : vector<2x32xf32> to vector<2x32xbf16>
    %c0_21 = arith.constant 0 : index
    %c0_22 = arith.constant 0 : index
    %51 = vector.load %arg8[%c0_21, %c0_22] : memref<32x32xbf16, #tpu.memory_space<vmem>>, vector<32x32xbf16>
    %cst_23 = arith.constant dense<0.000000e+00> : vector<2x32xf32>
    %52 = tpu.matmul %50, %51, %cst_23 {dimension_numbers = #tpu.dot_dimension_numbers<[1], [0], [0], [1], [0, 0, 1, 1], [], []>} : vector<2x32xbf16>, vector<32x32xbf16>, vector<2x32xf32> -> vector<2x32xf32>
    %c0_24 = arith.constant 0 : index
    %c0_25 = arith.constant 0 : index
    %53 = vector.load %arg9[%c0_24, %c0_25] : memref<1x32xf32, #tpu.memory_space<vmem>>, vector<1x32xf32>
    %54 = vector.broadcast %53 : vector<1x32xf32> to vector<2x32xf32>
    %55 = arith.addf %52, %54 : vector<2x32xf32>
    %cst_26 = arith.constant 0.000000e+00 : f32
    %56 = vector.broadcast %cst_26 : f32 to vector<2x32xf32>
    %57 = arith.maximumf %55, %56 : vector<2x32xf32>
    %58 = arith.truncf %57 : vector<2x32xf32> to vector<2x32xbf16>
    %c0_27 = arith.constant 0 : index
    %c0_28 = arith.constant 0 : index
    %59 = vector.load %arg10[%c0_27, %c0_28] : memref<32x32xbf16, #tpu.memory_space<vmem>>, vector<32x32xbf16>
    %cst_29 = arith.constant dense<0.000000e+00> : vector<2x32xf32>
    %60 = tpu.matmul %58, %59, %cst_29 {dimension_numbers = #tpu.dot_dimension_numbers<[1], [0], [0], [1], [0, 0, 1, 1], [], []>} : vector<2x32xbf16>, vector<32x32xbf16>, vector<2x32xf32> -> vector<2x32xf32>
    %c0_30 = arith.constant 0 : index
    %c0_31 = arith.constant 0 : index
    %61 = vector.load %arg11[%c0_30, %c0_31] : memref<1x32xf32, #tpu.memory_space<vmem>>, vector<1x32xf32>
    %62 = vector.broadcast %61 : vector<1x32xf32> to vector<2x32xf32>
    %63 = arith.addf %60, %62 : vector<2x32xf32>
    %64 = arith.truncf %47 : vector<2x32xf32> to vector<2x32xbf16>
    %c0_32 = arith.constant 0 : index
    %c0_33 = arith.constant 0 : index
    %65 = vector.load %arg12[%c0_32, %c0_33] : memref<32x32xbf16, #tpu.memory_space<vmem>>, vector<32x32xbf16>
    %cst_34 = arith.constant dense<0.000000e+00> : vector<2x32xf32>
    %66 = tpu.matmul %64, %65, %cst_34 {dimension_numbers = #tpu.dot_dimension_numbers<[1], [0], [0], [1], [0, 0, 1, 1], [], []>} : vector<2x32xbf16>, vector<32x32xbf16>, vector<2x32xf32> -> vector<2x32xf32>
    %c0_35 = arith.constant 0 : index
    %c0_36 = arith.constant 0 : index
    %67 = vector.load %arg13[%c0_35, %c0_36] : memref<1x32xf32, #tpu.memory_space<vmem>>, vector<1x32xf32>
    %68 = vector.broadcast %67 : vector<1x32xf32> to vector<2x32xf32>
    %69 = arith.addf %66, %68 : vector<2x32xf32>
    %70 = math.tanh %69 : vector<2x32xf32>
    %71 = arith.truncf %70 : vector<2x32xf32> to vector<2x32xbf16>
    %c0_37 = arith.constant 0 : index
    %c0_38 = arith.constant 0 : index
    %72 = vector.load %arg14[%c0_37, %c0_38] : memref<32x32xbf16, #tpu.memory_space<vmem>>, vector<32x32xbf16>
    %cst_39 = arith.constant dense<0.000000e+00> : vector<2x32xf32>
    %73 = tpu.matmul %71, %72, %cst_39 {dimension_numbers = #tpu.dot_dimension_numbers<[1], [0], [0], [1], [0, 0, 1, 1], [], []>} : vector<2x32xbf16>, vector<32x32xbf16>, vector<2x32xf32> -> vector<2x32xf32>
    %c0_40 = arith.constant 0 : index
    %c0_41 = arith.constant 0 : index
    %74 = vector.load %arg15[%c0_40, %c0_41] : memref<1x32xf32, #tpu.memory_space<vmem>>, vector<1x32xf32>
    %75 = vector.broadcast %74 : vector<1x32xf32> to vector<2x32xf32>
    %76 = arith.addf %73, %75 : vector<2x32xf32>
    %77 = arith.addf %63, %76 : vector<2x32xf32>
    %78 = math.tanh %77 : vector<2x32xf32>
    %c0_42 = arith.constant 0 : index
    %c0_43 = arith.constant 0 : index
    %c0_44 = arith.constant 0 : index
    %79 = vector.load %arg4[%c0_42, %c0_43, %c0_44] : memref<2x16x32xbf16, #tpu.memory_space<vmem>>, vector<2x16x32xbf16>
    %80 = arith.extf %79 : vector<2x16x32xbf16> to vector<2x16x32xf32>
    %81 = vector.shape_cast %76 : vector<2x32xf32> to vector<2x1x32xf32>
    %82 = vector.broadcast %81 : vector<2x1x32xf32> to vector<2x16x32xf32>
    %83 = arith.addf %80, %82 : vector<2x16x32xf32>
    %84 = math.tanh %83 : vector<2x16x32xf32>
    %c0_45 = arith.constant 0 : index
    %c0_46 = arith.constant 0 : index
    %85 = vector.load %arg16[%c0_45, %c0_46] : memref<1x32xf32, #tpu.memory_space<vmem>>, vector<1x32xf32>
    %c0_47 = arith.constant 0 : index
    %c0_48 = arith.constant 0 : index
    %86 = vector.load %arg17[%c0_47, %c0_48] : memref<1x1xf32, #tpu.memory_space<vmem>>, vector<1x1xf32>
    %87 = vector.broadcast %85 : vector<1x32xf32> to vector<2x32xf32>
    %88 = arith.mulf %78, %87 : vector<2x32xf32>
    %cst_49 = arith.constant dense<0.000000e+00> : vector<2xf32>
    %89 = vector.multi_reduction <add>, %88, %cst_49 [1] : vector<2x32xf32> to vector<2xf32>
    %90 = vector.shape_cast %89 : vector<2xf32> to vector<2x1xf32>
    %91 = vector.broadcast %86 : vector<1x1xf32> to vector<2x1xf32>
    %92 = arith.addf %90, %91 : vector<2x1xf32>
    %93 = vector.shape_cast %85 : vector<1x32xf32> to vector<1x1x32xf32>
    %94 = vector.broadcast %93 : vector<1x1x32xf32> to vector<2x16x32xf32>
    %95 = arith.mulf %84, %94 : vector<2x16x32xf32>
    %cst_50 = arith.constant dense<0.000000e+00> : vector<2x16xf32>
    %96 = vector.multi_reduction <add>, %95, %cst_50 [2] : vector<2x16x32xf32> to vector<2x16xf32>
    %97 = vector.broadcast %86 : vector<1x1xf32> to vector<2x16xf32>
    %98 = arith.addf %96, %97 : vector<2x16xf32>
    %cst_51 = arith.constant dense<0xFF800000> : vector<2xf32>
    %99 = vector.multi_reduction <maximumf>, %98, %cst_51 [1] : vector<2x16xf32> to vector<2xf32>
    %100 = vector.shape_cast %99 : vector<2xf32> to vector<2x1xf32>
    %101 = arith.maximumf %100, %92 : vector<2x1xf32>
    %102 = arith.subf %92, %101 : vector<2x1xf32>
    %103 = math.exp %102 : vector<2x1xf32>
    %104 = vector.broadcast %101 : vector<2x1xf32> to vector<2x16xf32>
    %105 = arith.subf %98, %104 : vector<2x16xf32>
    %106 = math.exp %105 : vector<2x16xf32>
    %cst_52 = arith.constant dense<0.000000e+00> : vector<2xf32>
    %107 = vector.multi_reduction <add>, %106, %cst_52 [1] : vector<2x16xf32> to vector<2xf32>
    %108 = vector.shape_cast %107 : vector<2xf32> to vector<2x1xf32>
    %109 = arith.addf %103, %108 : vector<2x1xf32>
    %110 = tpu.reciprocal %109 {approx = true} : vector<2x1xf32> -> vector<2x1xf32>
    %111 = arith.mulf %103, %110 : vector<2x1xf32>
    %112 = vector.broadcast %110 : vector<2x1xf32> to vector<2x16xf32>
    %113 = arith.mulf %106, %112 : vector<2x16xf32>
    %114 = vector.shape_cast %113 : vector<2x16xf32> to vector<2x1x16xf32>
    %115 = arith.truncf %114 : vector<2x1x16xf32> to vector<2x1x16xbf16>
    %c0_53 = arith.constant 0 : index
    %c0_54 = arith.constant 0 : index
    %c0_55 = arith.constant 0 : index
    %116 = vector.load %arg3[%c0_53, %c0_54, %c0_55] : memref<2x16x32xbf16, #tpu.memory_space<vmem>>, vector<2x16x32xbf16>
    "tpu.trace_start"() <{level = 10 : i32, message = "bis,bsd->bid"}> : () -> ()
    %cst_56 = arith.constant dense<0.000000e+00> : vector<2x1x32xf32>
    %117 = tpu.matmul %115, %116, %cst_56 {dimension_numbers = #tpu.dot_dimension_numbers<[2], [1], [1], [2], [0, 0, 0, 1, 1, 2], [0], [0]>} : vector<2x1x16xbf16>, vector<2x16x32xbf16>, vector<2x1x32xf32> -> vector<2x1x32xf32>
    "tpu.trace_stop"() : () -> ()
    %118 = vector.shape_cast %117 : vector<2x1x32xf32> to vector<2x32xf32>
    %119 = vector.broadcast %111 : vector<2x1xf32> to vector<2x32xf32>
    %120 = arith.mulf %119, %57 : vector<2x32xf32>
    %121 = arith.addf %120, %118 : vector<2x32xf32>
    %122 = arith.addf %121, %70 : vector<2x32xf32>
    %123 = arith.truncf %122 : vector<2x32xf32> to vector<2x32xbf16>
    %c0_57 = arith.constant 0 : index
    %c0_58 = arith.constant 0 : index
    %124 = vector.load %arg18[%c0_57, %c0_58] : memref<32x32xbf16, #tpu.memory_space<vmem>>, vector<32x32xbf16>
    %cst_59 = arith.constant dense<0.000000e+00> : vector<2x32xf32>
    %125 = tpu.matmul %123, %124, %cst_59 {dimension_numbers = #tpu.dot_dimension_numbers<[1], [0], [0], [1], [0, 0, 1, 1], [], []>} : vector<2x32xbf16>, vector<32x32xbf16>, vector<2x32xf32> -> vector<2x32xf32>
    %c0_60 = arith.constant 0 : index
    %c0_61 = arith.constant 0 : index
    %126 = vector.load %arg19[%c0_60, %c0_61] : memref<1x32xf32, #tpu.memory_space<vmem>>, vector<1x32xf32>
    %127 = vector.broadcast %126 : vector<1x32xf32> to vector<2x32xf32>
    %128 = arith.addf %125, %127 : vector<2x32xf32>
    %129 = math.tanh %128 : vector<2x32xf32>
    %130 = arith.truncf %129 : vector<2x32xf32> to vector<2x32xbf16>
    %c0_62 = arith.constant 0 : index
    %c0_63 = arith.constant 0 : index
    %c0_64 = arith.constant 0 : index
    %131 = vector.load %arg20[%c0_62, %c0_63, %c0_64] : memref<1x2x32xbf16, #tpu.memory_space<vmem>>, vector<1x2x32xbf16>
    %132 = vector.shape_cast %131 : vector<1x2x32xbf16> to vector<2x32xbf16>
    %133 = vector.shape_cast %130 : vector<2x32xbf16> to vector<1x2x32xbf16>
    tpu.vector_store %arg20[%c0_62, %c0_63, %c0_64], %133 {strides = array<i32>} : memref<1x2x32xbf16, #tpu.memory_space<vmem>>, vector<1x2x32xbf16>,
    return
  }
  func.func @transform_0(%arg0: i32, %arg1: i32) -> (i32, i32, i32) {
    %c0_i32 = arith.constant 0 : i32
    %c0_i32_0 = arith.constant 0 : i32
    return %arg1, %arg0, %c0_i32 : i32, i32, i32
  }
  func.func @transform_1(%arg0: i32, %arg1: i32) -> (i32, i32, i32) {
    %c0_i32 = arith.constant 0 : i32
    %c0_i32_0 = arith.constant 0 : i32
    %c0_i32_1 = arith.constant 0 : i32
    return %arg0, %c0_i32, %c0_i32_0 : i32, i32, i32
  }
  func.func @transform_2(%arg0: i32, %arg1: i32) -> (i32, i32, i32) {
    %c0_i32 = arith.constant 0 : i32
    %c0_i32_0 = arith.constant 0 : i32
    %c0_i32_1 = arith.constant 0 : i32
    return %arg0, %c0_i32, %c0_i32_0 : i32, i32, i32
  }
  func.func @transform_3(%arg0: i32, %arg1: i32) -> (i32, i32) {
    %c0_i32 = arith.constant 0 : i32
    %c0_i32_0 = arith.constant 0 : i32
    return %arg0, %c0_i32 : i32, i32
  }
  func.func @transform_4(%arg0: i32, %arg1: i32) -> (i32, i32) {
    %c0_i32 = arith.constant 0 : i32
    %c0_i32_0 = arith.constant 0 : i32
    %c0_i32_1 = arith.constant 0 : i32
    return %c0_i32, %c0_i32_0 : i32, i32
  }
  func.func @transform_5(%arg0: i32, %arg1: i32) -> (i32, i32) {
    %c0_i32 = arith.constant 0 : i32
    %c0_i32_0 = arith.constant 0 : i32
    %c0_i32_1 = arith.constant 0 : i32
    return %c0_i32, %c0_i32_0 : i32, i32
  }
  func.func @transform_6(%arg0: i32, %arg1: i32) -> (i32, i32) {
    %c0_i32 = arith.constant 0 : i32
    %c0_i32_0 = arith.constant 0 : i32
    %c0_i32_1 = arith.constant 0 : i32
    return %c0_i32, %c0_i32_0 : i32, i32
  }
  func.func @transform_7(%arg0: i32, %arg1: i32) -> (i32, i32) {
    %c0_i32 = arith.constant 0 : i32
    %c0_i32_0 = arith.constant 0 : i32
    %c0_i32_1 = arith.constant 0 : i32
    return %c0_i32, %c0_i32_0 : i32, i32
  }
  func.func @transform_8(%arg0: i32, %arg1: i32) -> (i32, i32) {
    %c0_i32 = arith.constant 0 : i32
    %c0_i32_0 = arith.constant 0 : i32
    %c0_i32_1 = arith.constant 0 : i32
    return %c0_i32, %c0_i32_0 : i32, i32
  }
  func.func @transform_9(%arg0: i32, %arg1: i32) -> (i32, i32) {
    %c0_i32 = arith.constant 0 : i32
    %c0_i32_0 = arith.constant 0 : i32
    %c0_i32_1 = arith.constant 0 : i32
    return %c0_i32, %c0_i32_0 : i32, i32
  }
  func.func @transform_10(%arg0: i32, %arg1: i32) -> (i32, i32) {
    %c0_i32 = arith.constant 0 : i32
    %c0_i32_0 = arith.constant 0 : i32
    %c0_i32_1 = arith.constant 0 : i32
    return %c0_i32, %c0_i32_0 : i32, i32
  }
  func.func @transform_11(%arg0: i32, %arg1: i32) -> (i32, i32) {
    %c0_i32 = arith.constant 0 : i32
    %c0_i32_0 = arith.constant 0 : i32
    %c0_i32_1 = arith.constant 0 : i32
    return %c0_i32, %c0_i32_0 : i32, i32
  }
  func.func @transform_12(%arg0: i32, %arg1: i32) -> (i32, i32) {
    %c0_i32 = arith.constant 0 : i32
    %c0_i32_0 = arith.constant 0 : i32
    %c0_i32_1 = arith.constant 0 : i32
    return %c0_i32, %c0_i32_0 : i32, i32
  }
  func.func @transform_13(%arg0: i32, %arg1: i32) -> (i32, i32) {
    %c0_i32 = arith.constant 0 : i32
    %c0_i32_0 = arith.constant 0 : i32
    %c0_i32_1 = arith.constant 0 : i32
    return %c0_i32, %c0_i32_0 : i32, i32
  }
  func.func @transform_14(%arg0: i32, %arg1: i32) -> (i32, i32) {
    %c0_i32 = arith.constant 0 : i32
    %c0_i32_0 = arith.constant 0 : i32
    %c0_i32_1 = arith.constant 0 : i32
    return %c0_i32, %c0_i32_0 : i32, i32
  }
  func.func @transform_15(%arg0: i32, %arg1: i32) -> (i32, i32) {
    %c0_i32 = arith.constant 0 : i32
    %c0_i32_0 = arith.constant 0 : i32
    %c0_i32_1 = arith.constant 0 : i32
    return %c0_i32, %c0_i32_0 : i32, i32
  }
  func.func @transform_16(%arg0: i32, %arg1: i32) -> (i32, i32) {
    %c0_i32 = arith.constant 0 : i32
    %c0_i32_0 = arith.constant 0 : i32
    %c0_i32_1 = arith.constant 0 : i32
    return %c0_i32, %c0_i32_0 : i32, i32
  }
  func.func @transform_17(%arg0: i32, %arg1: i32) -> (i32, i32) {
    %c0_i32 = arith.constant 0 : i32
    %c0_i32_0 = arith.constant 0 : i32
    %c0_i32_1 = arith.constant 0 : i32
    return %c0_i32, %c0_i32_0 : i32, i32
  }
  func.func @transform_18(%arg0: i32, %arg1: i32) -> (i32, i32, i32) {
    %c0_i32 = arith.constant 0 : i32
    %c0_i32_0 = arith.constant 0 : i32
    return %arg1, %arg0, %c0_i32 : i32, i32, i32
  }
}

module attributes {stable_mosaic.version = 11 : i64} {
  func.func @_logit_kernel(%arg0: i32, %arg1: memref<16x32xbf16, #tpu.memory_space<vmem>>, %arg2: memref<32x128xbf16, #tpu.memory_space<vmem>>, %arg3: memref<1x128xf32, #tpu.memory_space<vmem>>, %arg4: memref<16x128xf32, #tpu.memory_space<vmem>>) attributes {dimension_semantics = [#tpu.dimension_semantics<parallel>], iteration_bounds = array<i64: 1>, scalar_prefetch = 0 : i64, scratch_operands = 0 : i64, tpu.core_type = #tpu.core_type<tc>, window_params = [{transform_indices = @transform_0, window_bounds = array<i64: 16, 32>}, {pipeline_mode = #tpu.pipeline_mode<synchronous>, transform_indices = @transform_1, window_bounds = array<i64: 32, 128>}, {pipeline_mode = #tpu.pipeline_mode<synchronous>, transform_indices = @transform_2, window_bounds = array<i64: 1, 128>}, {transform_indices = @transform_3, window_bounds = array<i64: 16, 128>}]} {
    %c0 = arith.constant 0 : index
    %c0_0 = arith.constant 0 : index
    %0 = vector.load %arg1[%c0, %c0_0] : memref<16x32xbf16, #tpu.memory_space<vmem>>, vector<16x32xbf16>
    %c0_1 = arith.constant 0 : index
    %c0_2 = arith.constant 0 : index
    %1 = vector.load %arg2[%c0_1, %c0_2] : memref<32x128xbf16, #tpu.memory_space<vmem>>, vector<32x128xbf16>
    %cst = arith.constant dense<0.000000e+00> : vector<16x128xf32>
    %2 = tpu.matmul %0, %1, %cst {dimension_numbers = #tpu.dot_dimension_numbers<[1], [0], [0], [1], [0, 0, 1, 1], [], []>} : vector<16x32xbf16>, vector<32x128xbf16>, vector<16x128xf32> -> vector<16x128xf32>
    %c0_3 = arith.constant 0 : index
    %c0_4 = arith.constant 0 : index
    %3 = vector.load %arg3[%c0_3, %c0_4] : memref<1x128xf32, #tpu.memory_space<vmem>>, vector<1x128xf32>
    %4 = vector.broadcast %3 : vector<1x128xf32> to vector<16x128xf32>
    %5 = arith.addf %2, %4 : vector<16x128xf32>
    %cst_5 = arith.constant dense<0xFF800000> : vector<16xf32>
    %6 = vector.multi_reduction <maximumf>, %5, %cst_5 [1] : vector<16x128xf32> to vector<16xf32>
    %7 = vector.shape_cast %6 : vector<16xf32> to vector<16x1xf32>
    %8 = vector.broadcast %7 : vector<16x1xf32> to vector<16x128xf32>
    %9 = arith.subf %5, %8 : vector<16x128xf32>
    %10 = math.exp %9 : vector<16x128xf32>
    %cst_6 = arith.constant dense<0.000000e+00> : vector<16xf32>
    %11 = vector.multi_reduction <add>, %10, %cst_6 [1] : vector<16x128xf32> to vector<16xf32>
    %12 = vector.shape_cast %11 : vector<16xf32> to vector<16x1xf32>
    %13 = math.log %12 : vector<16x1xf32>
    %14 = arith.addf %7, %13 : vector<16x1xf32>
    %15 = vector.broadcast %14 : vector<16x1xf32> to vector<16x128xf32>
    %16 = arith.subf %5, %15 : vector<16x128xf32>
    %c0_7 = arith.constant 0 : index
    %c0_8 = arith.constant 0 : index
    %17 = vector.load %arg4[%c0_7, %c0_8] : memref<16x128xf32, #tpu.memory_space<vmem>>, vector<16x128xf32>
    tpu.vector_store %arg4[%c0_7, %c0_8], %16 {strides = array<i32>} : memref<16x128xf32, #tpu.memory_space<vmem>>, vector<16x128xf32>,
    return
  }
  func.func @transform_0(%arg0: i32) -> (i32, i32) {
    %c0_i32 = arith.constant 0 : i32
    %c0_i32_0 = arith.constant 0 : i32
    return %arg0, %c0_i32 : i32, i32
  }
  func.func @transform_1(%arg0: i32) -> (i32, i32) {
    %c0_i32 = arith.constant 0 : i32
    %c0_i32_0 = arith.constant 0 : i32
    %c0_i32_1 = arith.constant 0 : i32
    return %c0_i32, %c0_i32_0 : i32, i32
  }
  func.func @transform_2(%arg0: i32) -> (i32, i32) {
    %c0_i32 = arith.constant 0 : i32
    %c0_i32_0 = arith.constant 0 : i32
    %c0_i32_1 = arith.constant 0 : i32
    return %c0_i32, %c0_i32_0 : i32, i32
  }
  func.func @transform_3(%arg0: i32) -> (i32, i32) {
    %c0_i32 = arith.constant 0 : i32
    %c0_i32_0 = arith.constant 0 : i32
    return %arg0, %c0_i32 : i32, i32
  }
}

</mosaic_0001>

<llo_original>
// kernel: tpu_custom_call.1
$region0: #{tpu_custom_call.1}
  #allocation0 [shape = 'u32[]', space=smem, size = 0x4, offset = 0x4, fixed_abs, tag = 'smem constant byte address 0x4 - core index']
  #allocation1 [shape = 'u32[72,128]{1,0:T(1,128)}', space=vmem, size = 0x9000, scoped, tag = 'internal scratch']
  %s0 = inlined_call_operand.hbm [shape: f32[8,128], index: 0, kind: input, shape index: {}]
  %s1 = inlined_call_operand.hbm [shape: f32[8,128], index: 1, kind: output, shape index: {}]
  %s2 = sld [smem:[#allocation0]]
  $region41: #{tpu_custom_call.1} parent=0
    _
  %s4 = ssub.s32 1, %s2
  %s5 = scalar_select 0, %s4, %s2
  $region1: #{tpu_custom_call.1} parent=0
    #allocation2 [shape = 'u8[4096]{0}', space=vmem, size = 0x1000, scoped, tag = 'input window, operand 0, single buffered']
    #allocation3 [shape = 's32[2]{0}', space=sflag, size = 0x8, scoped, tag = 'scoped memory for tpu_custom_call.1']
    #allocation4 [shape = 's32[2]{0}', space=sflag, size = 0x8, scoped, tag = 'scoped memory for tpu_custom_call.1']
    #allocation5 [shape = 'u8[4096]{0}', space=vmem, size = 0x1000, scoped, tag = 'output window, operand 0, single buffered']
    %6 = vsyncpa [#allocation3], 0
    %7 = vsyncpa [#allocation4], 0
    loop: start=0, step=1, limit=4
    $region2: #{tpu_custom_call.1} parent=1 // loop_pre_header
      _
    $region3: #{tpu_custom_call.1} parent=1 // loop_header
      %s9 = sphi 0, %s13
      %p10 = scmp.ge.s32.totalorder %s9, 4
      %s17 = sphi 0, %s17
      %s19 = sphi 0, %s17
      %s20 = sphi 0, %s19
      %s34 = sphi 0, %s20
      %s38 = sphi 0, %s38
      %s40 = sphi 0, %s38
      %s41 = sphi 0, %s40
      %s55 = sphi 0, %s41
    $region4: #{tpu_custom_call.1} parent=1 // loop_header_branch
      %12 = sbr.rel (%p10) target = $region8
    $region5: #{tpu_custom_call.1} parent=1 // loop_body
      %s14 = ssub.s32 %s9, 1
      %s15 = ssub.s32 %s9, 2
      %s16 = sadd.s32 %s9, 1
      %s18 = sadd.s32 %s17, 1
      %p21 = scmp.eq.s32.totalorder %s9, 1
      %p22 = scmp.ne.s32.totalorder %s17, %s19
      %p23 = scmp.eq.s32.totalorder %s9, 0
      %p24 = por %p22, %p23
      %p25 = scmp.ne.s32.totalorder %s17, %s19
      %p26 = scmp.eq.s32.totalorder %s14, 1
      %p27 = por %p25, %p26
      %p28 = scmp.ne.s32.totalorder %s19, %s20
      %p29 = scmp.eq.s32.totalorder %s14, 0
      %p30 = por %p28, %p29
      %p31 = scmp.ne.s32.totalorder %s19, %s20
      %p32 = scmp.eq.s32.totalorder %s15, 1
      %p33 = por %p31, %p32
      %p35 = scmp.ne.s32.totalorder %s20, %s34
      %p36 = scmp.eq.s32.totalorder %s15, 0
      %p37 = por %p35, %p36
      %s39 = sadd.s32 %s38, 1
      %p42 = scmp.eq.s32.totalorder %s9, 1
      %p43 = scmp.ne.s32.totalorder %s38, %s40
      %p44 = scmp.eq.s32.totalorder %s9, 0
      %p45 = por %p43, %p44
      %p46 = scmp.ne.s32.totalorder %s38, %s40
      %p47 = scmp.eq.s32.totalorder %s14, 1
      %p48 = por %p46, %p47
      %p49 = scmp.ne.s32.totalorder %s40, %s41
      %p50 = scmp.eq.s32.totalorder %s14, 0
      %p51 = por %p49, %p50
      %p52 = scmp.ne.s32.totalorder %s40, %s41
      %p53 = scmp.eq.s32.totalorder %s15, 1
      %p54 = por %p52, %p53
      %p56 = scmp.ne.s32.totalorder %s41, %s55
      %p57 = scmp.eq.s32.totalorder %s15, 0
      %p58 = por %p56, %p57
      %p59 = scmp.le.s32.totalorder 1, %s9
      %p60 = scmp.lt.s32.totalorder %s9, 3
      %p61 = pnand %p59, %p60
      %p62 = pneg %p61
      // Predicated region
      $region9: #{tpu_custom_call.1} parent=5 // pred_check
        _
      $region10: #{tpu_custom_call.1} parent=5 // pred_check_branch
        %64 = sbr.rel (%p61) target = $region12
      $region11: #{tpu_custom_call.1} parent=5 // pred_region
        %s65 = ssub.s32 %s9, 1
        // Predicated region
        $region13: #{tpu_custom_call.1} parent=11 // pred_check
          %p66 = pneg %p30
        $region14: #{tpu_custom_call.1} parent=11 // pred_check_branch
          %68 = sbr.rel (%p66) target = $region16
        $region15: #{tpu_custom_call.1} parent=11 // pred_region
          %70 = vsyncadd [#allocation3], 0
          %s72 = sshll.u32 %s0, 4
          %s73 = int_to_ptr.hbm [resolvable:$true] %s72
          %s74 = sshll.u32 [#allocation2], 4
          %s75 = int_to_ptr.vmem [resolvable:$true] %s74
          %77 = dma.hbm_to_vmem [thread:$0]  %s73, 128, %s75, [#allocation3]
        $region16: #{tpu_custom_call.1} parent=11 // pred_fallthru
          _
      $region12: #{tpu_custom_call.1} parent=5 // pred_fallthru
        _
      %p78 = scmp.lt.s32.totalorder %s9, 2
      // Predicated region
      $region17: #{tpu_custom_call.1} parent=5 // pred_check
        %p79 = pneg %p78
      $region18: #{tpu_custom_call.1} parent=5 // pred_check_branch
        %81 = sbr.rel (%p79) target = $region20
      $region19: #{tpu_custom_call.1} parent=5 // pred_region
        _
      $region20: #{tpu_custom_call.1} parent=5 // pred_fallthru
        _
      %p82 = scmp.le.s32.totalorder 1, %s9
      %p83 = scmp.lt.s32.totalorder %s9, 3
      %p84 = pnand %p82, %p83
      %p85 = pneg %p84
      // Predicated region
      $region21: #{tpu_custom_call.1} parent=5 // pred_check
        _
      $region22: #{tpu_custom_call.1} parent=5 // pred_check_branch
        %87 = sbr.rel (%p84) target = $region24
      $region23: #{tpu_custom_call.1} parent=5 // pred_region
        %s88 = ssub.s32 %s9, 1
        // Predicated region
        $region25: #{tpu_custom_call.1} parent=23 // pred_check
          %p89 = pneg %p30
        $region26: #{tpu_custom_call.1} parent=23 // pred_check_branch
          %91 = sbr.rel (%p89) target = $region28
        $region27: #{tpu_custom_call.1} parent=23 // pred_region
          %93 = dma.done [#allocation3], 128
        $region28: #{tpu_custom_call.1} parent=23 // pred_fallthru
          _
        %p94 = pneg %p30
        %p95 = pneg %p27
        %p96 = pneg %p51
        %p97 = pneg %p48
        %v98 = vld [vmem:[#allocation2] sm:$0xff]
        %v99 = vadd.f32 %v98, 1.0
        %100 = vst [vmem:[#allocation5] sm:$0xff] %v99
        // Predicated region
        $region29: #{tpu_custom_call.1} parent=23 // pred_check
          %p101 = pneg %p48
        $region30: #{tpu_custom_call.1} parent=23 // pred_check_branch
          %103 = sbr.rel (%p101) target = $region32
        $region31: #{tpu_custom_call.1} parent=23 // pred_region
          %105 = vsyncadd [#allocation4], 0
          %s107 = sshll.u32 [#allocation5], 4
          %s108 = int_to_ptr.vmem [resolvable:$true] %s107
          %s109 = sshll.u32 %s1, 4
          %s110 = int_to_ptr.hbm [resolvable:$true] %s109
          %112 = dma.vmem_to_hbm [thread:$0]  %s108, 128, %s110, [#allocation4]
        $region32: #{tpu_custom_call.1} parent=23 // pred_fallthru
          _
        // Predicated region
        $region33: #{tpu_custom_call.1} parent=23 // pred_check
          %p113 = pneg %p48
        $region34: #{tpu_custom_call.1} parent=23 // pred_check_branch
          %115 = sbr.rel (%p113) target = $region36
        $region35: #{tpu_custom_call.1} parent=23 // pred_region
          %117 = dma.done [#allocation4], 128
        $region36: #{tpu_custom_call.1} parent=23 // pred_fallthru
          _
      $region24: #{tpu_custom_call.1} parent=5 // pred_fallthru
        _
      %p118 = scmp.le.s32.totalorder 2, %s9
      // Predicated region
      $region37: #{tpu_custom_call.1} parent=5 // pred_check
        %p119 = pneg %p118
      $region38: #{tpu_custom_call.1} parent=5 // pred_check_branch
        %121 = sbr.rel (%p119) target = $region40
      $region39: #{tpu_custom_call.1} parent=5 // pred_region
        %s122 = ssub.s32 %s9, 2
      $region40: #{tpu_custom_call.1} parent=5 // pred_fallthru
        _
    $region6: #{tpu_custom_call.1} parent=1 // loop_footer
      %s13 = sadd.s32 1, %s9
    $region7: #{tpu_custom_call.1} parent=1 // loop_footer_branch
      %8 = sbr.rel target = $region3
    $region8: #{tpu_custom_call.1} parent=1 // loop_exit
      _
    %123 = vsyncpa [#allocation3], 1
    %s124 = scalar_lea.sflag [#allocation3], 1
    %125 = vsyncpa %s124, 1
    %126 = vsyncpa [#allocation4], 1
    %s127 = scalar_lea.sflag [#allocation4], 1
    %128 = vsyncpa %s127, 1

// kernel: tpu_custom_call.1
$region0: #{tpu_custom_call.1}
  #allocation0 [shape = 'u32[]', space=smem, size = 0x4, offset = 0x4, fixed_abs, tag = 'smem constant byte address 0x4 - core index']
  #allocation1 [shape = 'u32[72,128]{1,0:T(1,128)}', space=vmem, size = 0x9000, scoped, tag = 'internal scratch']
  %s0 = inlined_call_operand.hbm [shape: bf16[8,128], index: 0, kind: input, shape index: {}]
  %s1 = inlined_call_operand.hbm [shape: bf16[8,128], index: 1, kind: output, shape index: {}]
  %s2 = sld [smem:[#allocation0]]
  $region18: #{tpu_custom_call.1} parent=0
    _
  %s4 = ssub.s32 1, %s2
  %s5 = scalar_select 0, %s4, %s2
  $region1: #{tpu_custom_call.1} parent=0
    #allocation2 [shape = 'u8[2048]{0}', space=vmem, size = 0x800, scoped, tag = 'input window, operand 0, single buffered']
    #allocation3 [shape = 's32[1]{0}', space=sflag, size = 0x4, scoped, tag = 'scoped memory for tpu_custom_call.1']
    #allocation4 [shape = 's32[1]{0}', space=sflag, size = 0x4, scoped, tag = 'scoped memory for tpu_custom_call.1']
    #allocation5 [shape = 'u8[2048]{0}', space=vmem, size = 0x800, scoped, tag = 'output window, operand 0, single buffered']
    %6 = vsyncpa [#allocation3], 0
    %7 = vsyncpa [#allocation4], 0
    // Predicated region
    $region2: #{tpu_custom_call.1} parent=1 // pred_check
      _
    $region3: #{tpu_custom_call.1} parent=1 // pred_check_branch
      %9 = sbr.rel (0) target = $region5
    $region4: #{tpu_custom_call.1} parent=1 // pred_region
      %11 = vsyncadd [#allocation3], 0
      %s13 = sshll.u32 %s0, 4
      %s14 = int_to_ptr.hbm [resolvable:$true] %s13
      %s15 = sshll.u32 [#allocation2], 4
      %s16 = int_to_ptr.vmem [resolvable:$true] %s15
      %18 = dma.hbm_to_vmem [thread:$0]  %s14, 64, %s16, [#allocation3]
    $region5: #{tpu_custom_call.1} parent=1 // pred_fallthru
      _
    // Predicated region
    $region6: #{tpu_custom_call.1} parent=1 // pred_check
      _
    $region7: #{tpu_custom_call.1} parent=1 // pred_check_branch
      %20 = sbr.rel (0) target = $region9
    $region8: #{tpu_custom_call.1} parent=1 // pred_region
      %22 = dma.done [#allocation3], 64
    $region9: #{tpu_custom_call.1} parent=1 // pred_fallthru
      _
    %v23 = vld [vmem:[#allocation2] sm:$0xf]
    %v24 = vunpack.c.l.bf16 %v23
    %v25 = vtanh.pop %v24
    %v26 = vpack.c.bf16 %v25, %v25
    %27 = vst [vmem:[#allocation5] sm:$0xf] %v26
    // Predicated region
    $region10: #{tpu_custom_call.1} parent=1 // pred_check
      _
    $region11: #{tpu_custom_call.1} parent=1 // pred_check_branch
      %29 = sbr.rel (0) target = $region13
    $region12: #{tpu_custom_call.1} parent=1 // pred_region
      %31 = vsyncadd [#allocation4], 0
      %s33 = sshll.u32 [#allocation5], 4
      %s34 = int_to_ptr.vmem [resolvable:$true] %s33
      %s35 = sshll.u32 %s1, 4
      %s36 = int_to_ptr.hbm [resolvable:$true] %s35
      %38 = dma.vmem_to_hbm [thread:$0]  %s34, 64, %s36, [#allocation4]
    $region13: #{tpu_custom_call.1} parent=1 // pred_fallthru
      _
    // Predicated region
    $region14: #{tpu_custom_call.1} parent=1 // pred_check
      _
    $region15: #{tpu_custom_call.1} parent=1 // pred_check_branch
      %40 = sbr.rel (0) target = $region17
    $region16: #{tpu_custom_call.1} parent=1 // pred_region
      %42 = dma.done [#allocation4], 64
    $region17: #{tpu_custom_call.1} parent=1 // pred_fallthru
      _
    %43 = vsyncpa [#allocation3], 1
    %44 = vsyncpa [#allocation4], 1

// kernel: _forward_impl.5
$region0: #{_forward_impl.5}
  #allocation0 [shape = 'u32[]', space=smem, size = 0x4, offset = 0x4, fixed_abs, tag = 'smem constant byte address 0x4 - core index']
  #allocation1 [shape = 'u32[72,128]{1,0:T(1,128)}', space=vmem, size = 0x9000, scoped, tag = 'internal scratch']
  %s0 = inlined_call_operand.vmem [shape: bf16[16,32], index: 0, kind: input, shape index: {}]
  %s1 = inlined_call_operand.vmem [shape: bf16[32,128], index: 1, kind: input, shape index: {}]
  %s2 = inlined_call_operand.vmem [shape: f32[1,128], index: 2, kind: input, shape index: {}]
  %s3 = inlined_call_operand.vmem [shape: f32[16,128], index: 3, kind: output, shape index: {}]
  %s4 = sld [smem:[#allocation0]]
  $region22: #{_forward_impl.5} parent=0
    _
  %s6 = ssub.s32 1, %s4
  %s7 = scalar_select 0, %s6, %s4
  // Predicated region
  $region2: #{_forward_impl.5} parent=0 // pred_check
    _
  $region3: #{_forward_impl.5} parent=0 // pred_check_branch
    %9 = sbr.rel (0) target = $region5
  $region4: #{_forward_impl.5} parent=0 // pred_region
    _
  $region5: #{_forward_impl.5} parent=0 // pred_fallthru
    _
  // Predicated region
  $region6: #{_forward_impl.5} parent=0 // pred_check
    _
  $region7: #{_forward_impl.5} parent=0 // pred_check_branch
    %11 = sbr.rel (0) target = $region9
  $region8: #{_forward_impl.5} parent=0 // pred_region
    _
  $region9: #{_forward_impl.5} parent=0 // pred_fallthru
    _
  // Predicated region
  $region10: #{_forward_impl.5} parent=0 // pred_check
    _
  $region11: #{_forward_impl.5} parent=0 // pred_check_branch
    %13 = sbr.rel (0) target = $region13
  $region12: #{_forward_impl.5} parent=0 // pred_region
    _
  $region13: #{_forward_impl.5} parent=0 // pred_fallthru
    _
  %v15 = vld [vmem:[%s0] sm:$0xf]
  %v16 = vld [vmem:[%s0 + $0x4] sm:$0xf]
  %v17 = vld [vmem:[%s1] sm:$0xf]
  %v18 = vld [vmem:[%s1 + $0x4] sm:$0xf]
  %v19 = vld [vmem:[%s1 + $0x8] sm:$0xf]
  %v20 = vld [vmem:[%s1 + $0xc] sm:$0xf]
  %v21 = vld [vmem:[%s2] sm:$0x1]
  %v23 = vperm.slane %v21, 0
  %v27 = vunpack.c.l.b16 %v15
  %v28 = vunpack.c.l.b16 %v16
  %v29 = vpack.c.b16 %v28, %v27
  %v34 = vunpack.c.l.b16 %v17
  %v35 = vunpack.c.l.b16 %v18
  %v36 = vunpack.c.l.b16 %v19
  %v37 = vunpack.c.l.b16 %v20
  %v38 = vpack.c.b16 %v35, %v34
  %v39 = vpack.c.b16 %v37, %v36
  %vm42 = vcmask 261120
  %v44 = vsel %vm42, %v29, 0
  %46 = vmatpush.bf16.msra.mxu0 0
  %47 = vmatpush.bf16.msra.mxu0 0
  %48 = vmatpush.bf16.msra.mxu0 0
  %49 = vmatpush.bf16.msra.mxu0 0
  %50 = vmatpush.bf16.msra.mxu0 0
  %51 = vmatpush.bf16.msra.mxu0 0
  %52 = vmatpush.bf16.msra.mxu0 %v39
  %53 = vmatpush.bf16.msra.mxu0 %v38
  %54 = vmatmul.bf16.gmra.mxu0 %v44
  %v55 = vpop.f32.mrf.mxu0
  %v56 = vadd.f32 %v23, %v55
  %v57 = vpop.f32.mrf.mxu0
  %v58 = vadd.f32 %v23, %v57
  %59 = vdwg.mxu0
  %60 = vmax.xlane.f32.xlu0 %v56
  %v61 = vpop.xlane.xlu0 %60
  %62 = vmax.xlane.f32.xlu0 %v58
  %v63 = vpop.xlane.xlu0 %62
  %v64 = vsub.f32 %v56, %v61
  %v65 = vsub.f32 %v58, %v63
  %v66 = vmul.f32 %v64, 1.442695
  %v67 = vpow.pop %v66
  %v68 = vmul.f32 %v65, 1.442695
  %v69 = vpow.pop %v68
  %70 = vadd.xlane.f32.xlu0 %v67
  %v71 = vpop.xlane.xlu0 %70
  %72 = vadd.xlane.f32.xlu0 %v69
  %v73 = vpop.xlane.xlu0 %72
  %v74 = vlog2.pop %v71
  %v75 = vmul.f32 %v74, 0.6931472
  %v76 = vlog2.pop %v73
  %v77 = vmul.f32 %v76, 0.6931472
  %v78 = vadd.f32 %v61, %v75
  %v79 = vadd.f32 %v63, %v77
  %v80 = vsub.f32 %v56, %v78
  %v81 = vsub.f32 %v58, %v79
  %82 = vst [vmem:[%s3] sm:$0xff] %v80
  %83 = vst [vmem:[%s3 + $0x8] sm:$0xff] %v81
  // Predicated region
  $region14: #{_forward_impl.5} parent=0 // pred_check
    _
  $region15: #{_forward_impl.5} parent=0 // pred_check_branch
    %85 = sbr.rel (0) target = $region17
  $region16: #{_forward_impl.5} parent=0 // pred_region
    _
  $region17: #{_forward_impl.5} parent=0 // pred_fallthru
    _
  // Predicated region
  $region18: #{_forward_impl.5} parent=0 // pred_check
    _
  $region19: #{_forward_impl.5} parent=0 // pred_check_branch
    %87 = sbr.rel (0) target = $region21
  $region20: #{_forward_impl.5} parent=0 // pred_region
    _
  $region21: #{_forward_impl.5} parent=0 // pred_fallthru
    _

// kernel: _forward_impl.3
$region0: #{_forward_impl.3}
  #allocation0 [shape = 'u32[]', space=smem, size = 0x4, offset = 0x4, fixed_abs, tag = 'smem constant byte address 0x4 - core index']
  #allocation1 [shape = 'u32[72,128]{1,0:T(1,128)}', space=vmem, size = 0x9000, scoped, tag = 'internal scratch']
  %s0 = inlined_call_operand.vmem [shape: f32[32,64], index: 0, kind: input, shape index: {}]
  %s1 = inlined_call_operand.vmem [shape: bf16[64,32], index: 1, kind: input, shape index: {}]
  %s2 = inlined_call_operand.vmem [shape: f32[1,32], index: 2, kind: input, shape index: {}]
  %s3 = inlined_call_operand.vmem [shape: bf16[32,32], index: 3, kind: input, shape index: {}]
  %s4 = inlined_call_operand.vmem [shape: f32[1,32], index: 4, kind: input, shape index: {}]
  %s5 = inlined_call_operand.vmem [shape: bf16[32,32], index: 5, kind: output, shape index: {0}]
  %s6 = inlined_call_operand.vmem [shape: bf16[32,32], index: 6, kind: output, shape index: {1}]
  %7 = xla_tuple %s5, %s6
  %s8 = sld [smem:[#allocation0]]
  $region38: #{_forward_impl.3} parent=0
    _
  %s10 = ssub.s32 1, %s8
  %s11 = scalar_select 0, %s10, %s8
  // Predicated region
  $region2: #{_forward_impl.3} parent=0 // pred_check
    _
  $region3: #{_forward_impl.3} parent=0 // pred_check_branch
    %13 = sbr.rel (0) target = $region5
  $region4: #{_forward_impl.3} parent=0 // pred_region
    _
  $region5: #{_forward_impl.3} parent=0 // pred_fallthru
    _
  // Predicated region
  $region6: #{_forward_impl.3} parent=0 // pred_check
    _
  $region7: #{_forward_impl.3} parent=0 // pred_check_branch
    %15 = sbr.rel (0) target = $region9
  $region8: #{_forward_impl.3} parent=0 // pred_region
    _
  $region9: #{_forward_impl.3} parent=0 // pred_fallthru
    _
  // Predicated region
  $region10: #{_forward_impl.3} parent=0 // pred_check
    _
  $region11: #{_forward_impl.3} parent=0 // pred_check_branch
    %17 = sbr.rel (0) target = $region13
  $region12: #{_forward_impl.3} parent=0 // pred_region
    _
  $region13: #{_forward_impl.3} parent=0 // pred_fallthru
    _
  // Predicated region
  $region14: #{_forward_impl.3} parent=0 // pred_check
    _
  $region15: #{_forward_impl.3} parent=0 // pred_check_branch
    %19 = sbr.rel (0) target = $region17
  $region16: #{_forward_impl.3} parent=0 // pred_region
    _
  $region17: #{_forward_impl.3} parent=0 // pred_fallthru
    _
  // Predicated region
  $region18: #{_forward_impl.3} parent=0 // pred_check
    _
  $region19: #{_forward_impl.3} parent=0 // pred_check_branch
    %21 = sbr.rel (0) target = $region21
  $region20: #{_forward_impl.3} parent=0 // pred_region
    _
  $region21: #{_forward_impl.3} parent=0 // pred_fallthru
    _
  %v23 = vld [vmem:[%s0] sm:$0xff]
  %v24 = vld [vmem:[%s0 + $0x8] sm:$0xff]
  %v25 = vld [vmem:[%s0 + $0x10] sm:$0xff]
  %v26 = vld [vmem:[%s0 + $0x18] sm:$0xff]
  %v27 = vpack.c.bf16 %v24, %v23
  %v28 = vpack.c.bf16 %v26, %v25
  %v29 = vld [vmem:[%s1] sm:$0xf]
  %v30 = vld [vmem:[%s1 + $0x4] sm:$0xf]
  %v31 = vld [vmem:[%s1 + $0x8] sm:$0xf]
  %v32 = vld [vmem:[%s1 + $0xc] sm:$0xf]
  %v33 = vld [vmem:[%s1 + $0x10] sm:$0xf]
  %v34 = vld [vmem:[%s1 + $0x14] sm:$0xf]
  %v35 = vld [vmem:[%s1 + $0x18] sm:$0xf]
  %v36 = vld [vmem:[%s1 + $0x1c] sm:$0xf]
  %v37 = vld [vmem:[%s2] sm:$0x1]
  %v39 = vperm.slane %v37, 0
  %v49 = vunpack.c.l.b16 %v29
  %v50 = vunpack.c.l.b16 %v30
  %v51 = vunpack.c.l.b16 %v31
  %v52 = vunpack.c.l.b16 %v32
  %v53 = vunpack.c.l.b16 %v33
  %v54 = vunpack.c.l.b16 %v34
  %v55 = vunpack.c.l.b16 %v35
  %v56 = vunpack.c.l.b16 %v36
  %v57 = vpack.c.b16 %v50, %v49
  %v58 = vpack.c.b16 %v52, %v51
  %v59 = vpack.c.b16 %v54, %v53
  %v60 = vpack.c.b16 %v56, %v55
  %vm65 = vcmask 523264
  %v67 = vsel %vm65, %v27, 0
  %v70 = vsel %vm65, %v28, 0
  %72 = vmatpush.bf16.msra.mxu0 0
  %73 = vmatpush.bf16.msra.mxu0 0
  %74 = vmatpush.bf16.msra.mxu0 0
  %75 = vmatpush.bf16.msra.mxu0 0
  %76 = vmatpush.bf16.msra.mxu0 %v60
  %77 = vmatpush.bf16.msra.mxu0 %v59
  %78 = vmatpush.bf16.msra.mxu0 %v58
  %79 = vmatpush.bf16.msra.mxu0 %v57
  %80 = vmatmul.bf16.gmra.mxu0 %v67
  %v81 = vpop.f32.mrf.mxu0
  %v82 = vadd.f32 %v39, %v81
  %v83 = vpop.f32.mrf.mxu0
  %v84 = vadd.f32 %v39, %v83
  %85 = vmatmul.bf16.gmra.mxu0 %v70
  %v86 = vpop.f32.mrf.mxu0
  %v87 = vadd.f32 %v39, %v86
  %v88 = vpop.f32.mrf.mxu0
  %v89 = vadd.f32 %v39, %v88
  %90 = vdwg.mxu0
  %v91 = vmax.f32 %v82, 0.0
  %v92 = vmax.f32 %v84, 0.0
  %v93 = vmax.f32 %v87, 0.0
  %v94 = vmax.f32 %v89, 0.0
  %v95 = vpack.c.bf16 %v91, %v91
  %v96 = vpack.c.bf16 %v92, %v92
  %v97 = vpack.c.bf16 %v93, %v93
  %v98 = vpack.c.bf16 %v94, %v94
  %vm99 = vcmask 257024
  %100 = vst.msk [vmem:[%s5] sm:$0xf] %vm99, %v95
  %101 = vst.msk [vmem:[%s5 + $0x4] sm:$0xf] %vm99, %v96
  %102 = vst.msk [vmem:[%s5 + $0x8] sm:$0xf] %vm99, %v97
  %103 = vst.msk [vmem:[%s5 + $0xc] sm:$0xf] %vm99, %v98
  %v104 = vld [vmem:[%s3] sm:$0xf]
  %v105 = vld [vmem:[%s3 + $0x4] sm:$0xf]
  %v106 = vld [vmem:[%s3 + $0x8] sm:$0xf]
  %v107 = vld [vmem:[%s3 + $0xc] sm:$0xf]
  %v108 = vld [vmem:[%s4] sm:$0x1]
  %v110 = vperm.slane %v108, 0
  %v116 = vunpack.c.l.b16 %v95
  %v117 = vunpack.c.l.b16 %v96
  %v118 = vunpack.c.l.b16 %v97
  %v119 = vunpack.c.l.b16 %v98
  %v120 = vpack.c.b16 %v117, %v116
  %v121 = vpack.c.b16 %v119, %v118
  %v126 = vunpack.c.l.b16 %v104
  %v127 = vunpack.c.l.b16 %v105
  %v128 = vunpack.c.l.b16 %v106
  %v129 = vunpack.c.l.b16 %v107
  %v130 = vpack.c.b16 %v127, %v126
  %v131 = vpack.c.b16 %v129, %v128
  %vm134 = vcmask 261120
  %v136 = vsel %vm134, %v120, 0
  %v139 = vsel %vm134, %v121, 0
  %141 = vmatpush.bf16.msra.mxu0 0
  %142 = vmatpush.bf16.msra.mxu0 0
  %143 = vmatpush.bf16.msra.mxu0 0
  %144 = vmatpush.bf16.msra.mxu0 0
  %145 = vmatpush.bf16.msra.mxu0 0
  %146 = vmatpush.bf16.msra.mxu0 0
  %147 = vmatpush.bf16.msra.mxu0 %v131
  %148 = vmatpush.bf16.msra.mxu0 %v130
  %149 = vmatmul.bf16.gmra.mxu0 %v136
  %v150 = vpop.f32.mrf.mxu0
  %v151 = vadd.f32 %v110, %v150
  %v152 = vpop.f32.mrf.mxu0
  %v153 = vadd.f32 %v110, %v152
  %154 = vmatmul.bf16.gmra.mxu0 %v139
  %v155 = vpop.f32.mrf.mxu0
  %v156 = vadd.f32 %v110, %v155
  %v157 = vpop.f32.mrf.mxu0
  %v158 = vadd.f32 %v110, %v157
  %159 = vdwg.mxu0
  %v160 = vpack.c.bf16 %v151, %v151
  %v161 = vpack.c.bf16 %v153, %v153
  %v162 = vpack.c.bf16 %v156, %v156
  %v163 = vpack.c.bf16 %v158, %v158
  %164 = vst.msk [vmem:[%s6] sm:$0xf] %vm99, %v160
  %165 = vst.msk [vmem:[%s6 + $0x4] sm:$0xf] %vm99, %v161
  %166 = vst.msk [vmem:[%s6 + $0x8] sm:$0xf] %vm99, %v162
  %167 = vst.msk [vmem:[%s6 + $0xc] sm:$0xf] %vm99, %v163
  // Predicated region
  $region22: #{_forward_impl.3} parent=0 // pred_check
    _
  $region23: #{_forward_impl.3} parent=0 // pred_check_branch
    %169 = sbr.rel (0) target = $region25
  $region24: #{_forward_impl.3} parent=0 // pred_region
    _
  $region25: #{_forward_impl.3} parent=0 // pred_fallthru
    _
  // Predicated region
  $region26: #{_forward_impl.3} parent=0 // pred_check
    _
  $region27: #{_forward_impl.3} parent=0 // pred_check_branch
    %171 = sbr.rel (0) target = $region29
  $region28: #{_forward_impl.3} parent=0 // pred_region
    _
  $region29: #{_forward_impl.3} parent=0 // pred_fallthru
    _
  // Predicated region
  $region30: #{_forward_impl.3} parent=0 // pred_check
    _
  $region31: #{_forward_impl.3} parent=0 // pred_check_branch
    %173 = sbr.rel (0) target = $region33
  $region32: #{_forward_impl.3} parent=0 // pred_region
    _
  $region33: #{_forward_impl.3} parent=0 // pred_fallthru
    _
  // Predicated region
  $region34: #{_forward_impl.3} parent=0 // pred_check
    _
  $region35: #{_forward_impl.3} parent=0 // pred_check_branch
    %175 = sbr.rel (0) target = $region37
  $region36: #{_forward_impl.3} parent=0 // pred_region
    _
  $region37: #{_forward_impl.3} parent=0 // pred_fallthru
    _

// kernel: _forward_impl.4
$region0: #{_forward_impl.4}
  #allocation0 [shape = 'u32[]', space=smem, size = 0x4, offset = 0x4, fixed_abs, tag = 'smem constant byte address 0x4 - core index']
  #allocation1 [shape = 'u32[72,128]{1,0:T(1,128)}', space=vmem, size = 0x9000, scoped, tag = 'internal scratch']
  #allocation2 [shape = 'f32[2,32]{1,0:T(2,128)}', space=vmem, size = 0x400, scoped, tag = 'scratch operand']
  #allocation3 [shape = 'f32[2,32]{1,0:T(2,128)}', space=vmem, size = 0x400, scoped, tag = 'scratch operand']
  #allocation4 [shape = 'f32[1,1]{1,0:T(1,128)S(1)}', space=vmem, size = 0x200, scoped, tag = 'scoped memory for _forward_impl.4']
  %s0 = inlined_call_operand.vmem [shape: f32[7,2,32], index: 0, kind: input, shape index: {}]
  %s1 = inlined_call_operand.vmem [shape: bf16[2,16,32], index: 1, kind: input, shape index: {}]
  %s2 = inlined_call_operand.vmem [shape: bf16[2,16,32], index: 2, kind: input, shape index: {}]
  %s3 = inlined_call_operand.vmem [shape: f32[2,32], index: 3, kind: input, shape index: {}]
  %s4 = inlined_call_operand.vmem [shape: bf16[96,192], index: 4, kind: input, shape index: {}]
  %s5 = inlined_call_operand.vmem [shape: f32[1,192], index: 5, kind: input, shape index: {}]
  %s6 = inlined_call_operand.vmem [shape: bf16[32,32], index: 6, kind: input, shape index: {}]
  %s7 = inlined_call_operand.vmem [shape: f32[1,32], index: 7, kind: input, shape index: {}]
  %s8 = inlined_call_operand.vmem [shape: bf16[32,32], index: 8, kind: input, shape index: {}]
  %s9 = inlined_call_operand.vmem [shape: f32[1,32], index: 9, kind: input, shape index: {}]
  %s10 = inlined_call_operand.vmem [shape: bf16[32,32], index: 10, kind: input, shape index: {}]
  %s11 = inlined_call_operand.vmem [shape: f32[1,32], index: 11, kind: input, shape index: {}]
  %s12 = inlined_call_operand.vmem [shape: bf16[32,32], index: 12, kind: input, shape index: {}]
  %s13 = inlined_call_operand.vmem [shape: f32[1,32], index: 13, kind: input, shape index: {}]
  %s14 = inlined_call_operand.vmem [shape: f32[1,32], index: 14, kind: input, shape index: {}]
  %s15 = inlined_call_operand.<no memory space> [shape: f32[1,1], index: 15, kind: input, shape index: {}]
  %s16 = inlined_call_operand.vmem [shape: bf16[32,32], index: 16, kind: input, shape index: {}]
  %s17 = inlined_call_operand.vmem [shape: f32[1,32], index: 17, kind: input, shape index: {}]
  %s18 = inlined_call_operand.vmem [shape: bf16[7,2,32], index: 18, kind: output, shape index: {}]
  %s19 = sld [smem:[#allocation0]]
  $region109: #{_forward_impl.4} parent=0
    _
  %s21 = ssub.s32 1, %s19
  %s22 = scalar_select 0, %s21, %s19
  %v23 = vstv %s15
  %24 = vst [vmem:[#allocation4] sm:$0x1] %v23
  loop: start=0, step=1, limit=9
  $region2: #{_forward_impl.4} parent=0 // loop_pre_header
    _
  $region3: #{_forward_impl.4} parent=0 // loop_header
    %s26 = sphi 0, %s30
    %p27 = scmp.ge.s32.totalorder %s26, 9
    %s33 = sphi 0, %s45
    %s34 = sphi 0, %s41
    %s35 = sphi 0, %s33
    %s36 = sphi 0, %s34
    %s37 = sphi 0, %s35
    %s38 = sphi 0, %s36
    %s50 = sphi 0, %s52
    %s53 = sphi 0, %s50
    %s54 = sphi 0, %s53
    %s70 = sphi 0, %s54
    %s76 = sphi 0, %s78
    %s79 = sphi 0, %s76
    %s80 = sphi 0, %s79
    %s96 = sphi 0, %s80
    %s102 = sphi 0, %s104
    %s105 = sphi 0, %s102
    %s106 = sphi 0, %s105
    %s122 = sphi 0, %s106
    %s128 = sphi 0, %s130
    %s131 = sphi 0, %s128
    %s132 = sphi 0, %s131
    %s148 = sphi 0, %s132
    %s152 = sphi 0, %s152
    %s154 = sphi 0, %s152
    %s155 = sphi 0, %s154
    %s169 = sphi 0, %s155
    %s173 = sphi 0, %s173
    %s175 = sphi 0, %s173
    %s176 = sphi 0, %s175
    %s190 = sphi 0, %s176
    %s194 = sphi 0, %s194
    %s196 = sphi 0, %s194
    %s197 = sphi 0, %s196
    %s211 = sphi 0, %s197
    %s215 = sphi 0, %s215
    %s217 = sphi 0, %s215
    %s218 = sphi 0, %s217
    %s232 = sphi 0, %s218
    %s236 = sphi 0, %s236
    %s238 = sphi 0, %s236
    %s239 = sphi 0, %s238
    %s253 = sphi 0, %s239
    %s257 = sphi 0, %s257
    %s259 = sphi 0, %s257
    %s260 = sphi 0, %s259
    %s274 = sphi 0, %s260
    %s278 = sphi 0, %s278
    %s280 = sphi 0, %s278
    %s281 = sphi 0, %s280
    %s295 = sphi 0, %s281
    %s299 = sphi 0, %s299
    %s301 = sphi 0, %s299
    %s302 = sphi 0, %s301
    %s316 = sphi 0, %s302
    %s320 = sphi 0, %s320
    %s322 = sphi 0, %s320
    %s323 = sphi 0, %s322
    %s337 = sphi 0, %s323
    %s341 = sphi 0, %s341
    %s343 = sphi 0, %s341
    %s344 = sphi 0, %s343
    %s358 = sphi 0, %s344
    %s362 = sphi 0, %s362
    %s364 = sphi 0, %s362
    %s365 = sphi 0, %s364
    %s379 = sphi 0, %s365
    %s383 = sphi 0, %s383
    %s385 = sphi 0, %s383
    %s386 = sphi 0, %s385
    %s400 = sphi 0, %s386
    %s404 = sphi 0, %s404
    %s406 = sphi 0, %s404
    %s407 = sphi 0, %s406
    %s421 = sphi 0, %s407
    %s425 = sphi 0, %s425
    %s427 = sphi 0, %s425
    %s428 = sphi 0, %s427
    %s442 = sphi 0, %s428
    %s450 = sphi 0, %s452
    %s453 = sphi 0, %s450
    %s454 = sphi 0, %s453
    %s470 = sphi 0, %s454
  $region4: #{_forward_impl.4} parent=0 // loop_header_branch
    %29 = sbr.rel (%p27) target = $region8
  $region5: #{_forward_impl.4} parent=0 // loop_body
    %s31 = ssub.s32 %s26, 1
    %s32 = ssub.s32 %s26, 2
    %s39 = sadd.s32 1, %s34
    %p40 = scmp.ge.s32.totalorder %s39, 7
    %s41 = scalar_select %p40, 0, %s39
    %s42 = sadd.s32 1, %s33
    %s43 = scalar_select %p40, %s42, %s33
    %p44 = scmp.ge.s32.totalorder %s43, 1
    %s45 = scalar_select %p44, 0, %s43
    %s46 = ssub.s32 %s34, %s41
    %s47 = ssub.s32 %s33, %s45
    %s48 = sor.u32 %s46, %s47
    %p49 = scmp.eq.s32.totalorder %s48, 0
    %s51 = sadd.s32 %s50, 1
    %s52 = scalar_select %p49, %s50, %s51
    %p55 = pneg %p49
    %p56 = scmp.eq.s32.totalorder %s26, 6
    %p57 = por %p55, %p56
    %p58 = scmp.ne.s32.totalorder %s50, %s53
    %p59 = scmp.eq.s32.totalorder %s26, 0
    %p60 = por %p58, %p59
    %p61 = scmp.ne.s32.totalorder %s50, %s53
    %p62 = scmp.eq.s32.totalorder %s31, 6
    %p63 = por %p61, %p62
    %p64 = scmp.ne.s32.totalorder %s53, %s54
    %p65 = scmp.eq.s32.totalorder %s31, 0
    %p66 = por %p64, %p65
    %p67 = scmp.ne.s32.totalorder %s53, %s54
    %p68 = scmp.eq.s32.totalorder %s32, 6
    %p69 = por %p67, %p68
    %p71 = scmp.ne.s32.totalorder %s54, %s70
    %p72 = scmp.eq.s32.totalorder %s32, 0
    %p73 = por %p71, %p72
    %s74 = ssub.s32 %s33, %s45
    %p75 = scmp.eq.s32.totalorder %s74, 0
    %s77 = sadd.s32 %s76, 1
    %s78 = scalar_select %p75, %s76, %s77
    %p81 = pneg %p75
    %p82 = scmp.eq.s32.totalorder %s26, 6
    %p83 = por %p81, %p82
    %p84 = scmp.ne.s32.totalorder %s76, %s79
    %p85 = scmp.eq.s32.totalorder %s26, 0
    %p86 = por %p84, %p85
    %p87 = scmp.ne.s32.totalorder %s76, %s79
    %p88 = scmp.eq.s32.totalorder %s31, 6
    %p89 = por %p87, %p88
    %p90 = scmp.ne.s32.totalorder %s79, %s80
    %p91 = scmp.eq.s32.totalorder %s31, 0
    %p92 = por %p90, %p91
    %p93 = scmp.ne.s32.totalorder %s79, %s80
    %p94 = scmp.eq.s32.totalorder %s32, 6
    %p95 = por %p93, %p94
    %p97 = scmp.ne.s32.totalorder %s80, %s96
    %p98 = scmp.eq.s32.totalorder %s32, 0
    %p99 = por %p97, %p98
    %s100 = ssub.s32 %s33, %s45
    %p101 = scmp.eq.s32.totalorder %s100, 0
    %s103 = sadd.s32 %s102, 1
    %s104 = scalar_select %p101, %s102, %s103
    %p107 = pneg %p101
    %p108 = scmp.eq.s32.totalorder %s26, 6
    %p109 = por %p107, %p108
    %p110 = scmp.ne.s32.totalorder %s102, %s105
    %p111 = scmp.eq.s32.totalorder %s26, 0
    %p112 = por %p110, %p111
    %p113 = scmp.ne.s32.totalorder %s102, %s105
    %p114 = scmp.eq.s32.totalorder %s31, 6
    %p115 = por %p113, %p114
    %p116 = scmp.ne.s32.totalorder %s105, %s106
    %p117 = scmp.eq.s32.totalorder %s31, 0
    %p118 = por %p116, %p117
    %p119 = scmp.ne.s32.totalorder %s105, %s106
    %p120 = scmp.eq.s32.totalorder %s32, 6
    %p121 = por %p119, %p120
    %p123 = scmp.ne.s32.totalorder %s106, %s122
    %p124 = scmp.eq.s32.totalorder %s32, 0
    %p125 = por %p123, %p124
    %s126 = ssub.s32 %s33, %s45
    %p127 = scmp.eq.s32.totalorder %s126, 0
    %s129 = sadd.s32 %s128, 1
    %s130 = scalar_select %p127, %s128, %s129
    %p133 = pneg %p127
    %p134 = scmp.eq.s32.totalorder %s26, 6
    %p135 = por %p133, %p134
    %p136 = scmp.ne.s32.totalorder %s128, %s131
    %p137 = scmp.eq.s32.totalorder %s26, 0
    %p138 = por %p136, %p137
    %p139 = scmp.ne.s32.totalorder %s128, %s131
    %p140 = scmp.eq.s32.totalorder %s31, 6
    %p141 = por %p139, %p140
    %p142 = scmp.ne.s32.totalorder %s131, %s132
    %p143 = scmp.eq.s32.totalorder %s31, 0
    %p144 = por %p142, %p143
    %p145 = scmp.ne.s32.totalorder %s131, %s132
    %p146 = scmp.eq.s32.totalorder %s32, 6
    %p147 = por %p145, %p146
    %p149 = scmp.ne.s32.totalorder %s132, %s148
    %p150 = scmp.eq.s32.totalorder %s32, 0
    %p151 = por %p149, %p150
    %s153 = sadd.s32 %s152, 1
    %p156 = scmp.eq.s32.totalorder %s26, 6
    %p157 = scmp.ne.s32.totalorder %s152, %s154
    %p158 = scmp.eq.s32.totalorder %s26, 0
    %p159 = por %p157, %p158
    %p160 = scmp.ne.s32.totalorder %s152, %s154
    %p161 = scmp.eq.s32.totalorder %s31, 6
    %p162 = por %p160, %p161
    %p163 = scmp.ne.s32.totalorder %s154, %s155
    %p164 = scmp.eq.s32.totalorder %s31, 0
    %p165 = por %p163, %p164
    %p166 = scmp.ne.s32.totalorder %s154, %s155
    %p167 = scmp.eq.s32.totalorder %s32, 6
    %p168 = por %p166, %p167
    %p170 = scmp.ne.s32.totalorder %s155, %s169
    %p171 = scmp.eq.s32.totalorder %s32, 0
    %p172 = por %p170, %p171
    %s174 = sadd.s32 %s173, 1
    %p177 = scmp.eq.s32.totalorder %s26, 6
    %p178 = scmp.ne.s32.totalorder %s173, %s175
    %p179 = scmp.eq.s32.totalorder %s26, 0
    %p180 = por %p178, %p179
    %p181 = scmp.ne.s32.totalorder %s173, %s175
    %p182 = scmp.eq.s32.totalorder %s31, 6
    %p183 = por %p181, %p182
    %p184 = scmp.ne.s32.totalorder %s175, %s176
    %p185 = scmp.eq.s32.totalorder %s31, 0
    %p186 = por %p184, %p185
    %p187 = scmp.ne.s32.totalorder %s175, %s176
    %p188 = scmp.eq.s32.totalorder %s32, 6
    %p189 = por %p187, %p188
    %p191 = scmp.ne.s32.totalorder %s176, %s190
    %p192 = scmp.eq.s32.totalorder %s32, 0
    %p193 = por %p191, %p192
    %s195 = sadd.s32 %s194, 1
    %p198 = scmp.eq.s32.totalorder %s26, 6
    %p199 = scmp.ne.s32.totalorder %s194, %s196
    %p200 = scmp.eq.s32.totalorder %s26, 0
    %p201 = por %p199, %p200
    %p202 = scmp.ne.s32.totalorder %s194, %s196
    %p203 = scmp.eq.s32.totalorder %s31, 6
    %p204 = por %p202, %p203
    %p205 = scmp.ne.s32.totalorder %s196, %s197
    %p206 = scmp.eq.s32.totalorder %s31, 0
    %p207 = por %p205, %p206
    %p208 = scmp.ne.s32.totalorder %s196, %s197
    %p209 = scmp.eq.s32.totalorder %s32, 6
    %p210 = por %p208, %p209
    %p212 = scmp.ne.s32.totalorder %s197, %s211
    %p213 = scmp.eq.s32.totalorder %s32, 0
    %p214 = por %p212, %p213
    %s216 = sadd.s32 %s215, 1
    %p219 = scmp.eq.s32.totalorder %s26, 6
    %p220 = scmp.ne.s32.totalorder %s215, %s217
    %p221 = scmp.eq.s32.totalorder %s26, 0
    %p222 = por %p220, %p221
    %p223 = scmp.ne.s32.totalorder %s215, %s217
    %p224 = scmp.eq.s32.totalorder %s31, 6
    %p225 = por %p223, %p224
    %p226 = scmp.ne.s32.totalorder %s217, %s218
    %p227 = scmp.eq.s32.totalorder %s31, 0
    %p228 = por %p226, %p227
    %p229 = scmp.ne.s32.totalorder %s217, %s218
    %p230 = scmp.eq.s32.totalorder %s32, 6
    %p231 = por %p229, %p230
    %p233 = scmp.ne.s32.totalorder %s218, %s232
    %p234 = scmp.eq.s32.totalorder %s32, 0
    %p235 = por %p233, %p234
    %s237 = sadd.s32 %s236, 1
    %p240 = scmp.eq.s32.totalorder %s26, 6
    %p241 = scmp.ne.s32.totalorder %s236, %s238
    %p242 = scmp.eq.s32.totalorder %s26, 0
    %p243 = por %p241, %p242
    %p244 = scmp.ne.s32.totalorder %s236, %s238
    %p245 = scmp.eq.s32.totalorder %s31, 6
    %p246 = por %p244, %p245
    %p247 = scmp.ne.s32.totalorder %s238, %s239
    %p248 = scmp.eq.s32.totalorder %s31, 0
    %p249 = por %p247, %p248
    %p250 = scmp.ne.s32.totalorder %s238, %s239
    %p251 = scmp.eq.s32.totalorder %s32, 6
    %p252 = por %p250, %p251
    %p254 = scmp.ne.s32.totalorder %s239, %s253
    %p255 = scmp.eq.s32.totalorder %s32, 0
    %p256 = por %p254, %p255
    %s258 = sadd.s32 %s257, 1
    %p261 = scmp.eq.s32.totalorder %s26, 6
    %p262 = scmp.ne.s32.totalorder %s257, %s259
    %p263 = scmp.eq.s32.totalorder %s26, 0
    %p264 = por %p262, %p263
    %p265 = scmp.ne.s32.totalorder %s257, %s259
    %p266 = scmp.eq.s32.totalorder %s31, 6
    %p267 = por %p265, %p266
    %p268 = scmp.ne.s32.totalorder %s259, %s260
    %p269 = scmp.eq.s32.totalorder %s31, 0
    %p270 = por %p268, %p269
    %p271 = scmp.ne.s32.totalorder %s259, %s260
    %p272 = scmp.eq.s32.totalorder %s32, 6
    %p273 = por %p271, %p272
    %p275 = scmp.ne.s32.totalorder %s260, %s274
    %p276 = scmp.eq.s32.totalorder %s32, 0
    %p277 = por %p275, %p276
    %s279 = sadd.s32 %s278, 1
    %p282 = scmp.eq.s32.totalorder %s26, 6
    %p283 = scmp.ne.s32.totalorder %s278, %s280
    %p284 = scmp.eq.s32.totalorder %s26, 0
    %p285 = por %p283, %p284
    %p286 = scmp.ne.s32.totalorder %s278, %s280
    %p287 = scmp.eq.s32.totalorder %s31, 6
    %p288 = por %p286, %p287
    %p289 = scmp.ne.s32.totalorder %s280, %s281
    %p290 = scmp.eq.s32.totalorder %s31, 0
    %p291 = por %p289, %p290
    %p292 = scmp.ne.s32.totalorder %s280, %s281
    %p293 = scmp.eq.s32.totalorder %s32, 6
    %p294 = por %p292, %p293
    %p296 = scmp.ne.s32.totalorder %s281, %s295
    %p297 = scmp.eq.s32.totalorder %s32, 0
    %p298 = por %p296, %p297
    %s300 = sadd.s32 %s299, 1
    %p303 = scmp.eq.s32.totalorder %s26, 6
    %p304 = scmp.ne.s32.totalorder %s299, %s301
    %p305 = scmp.eq.s32.totalorder %s26, 0
    %p306 = por %p304, %p305
    %p307 = scmp.ne.s32.totalorder %s299, %s301
    %p308 = scmp.eq.s32.totalorder %s31, 6
    %p309 = por %p307, %p308
    %p310 = scmp.ne.s32.totalorder %s301, %s302
    %p311 = scmp.eq.s32.totalorder %s31, 0
    %p312 = por %p310, %p311
    %p313 = scmp.ne.s32.totalorder %s301, %s302
    %p314 = scmp.eq.s32.totalorder %s32, 6
    %p315 = por %p313, %p314
    %p317 = scmp.ne.s32.totalorder %s302, %s316
    %p318 = scmp.eq.s32.totalorder %s32, 0
    %p319 = por %p317, %p318
    %s321 = sadd.s32 %s320, 1
    %p324 = scmp.eq.s32.totalorder %s26, 6
    %p325 = scmp.ne.s32.totalorder %s320, %s322
    %p326 = scmp.eq.s32.totalorder %s26, 0
    %p327 = por %p325, %p326
    %p328 = scmp.ne.s32.totalorder %s320, %s322
    %p329 = scmp.eq.s32.totalorder %s31, 6
    %p330 = por %p328, %p329
    %p331 = scmp.ne.s32.totalorder %s322, %s323
    %p332 = scmp.eq.s32.totalorder %s31, 0
    %p333 = por %p331, %p332
    %p334 = scmp.ne.s32.totalorder %s322, %s323
    %p335 = scmp.eq.s32.totalorder %s32, 6
    %p336 = por %p334, %p335
    %p338 = scmp.ne.s32.totalorder %s323, %s337
    %p339 = scmp.eq.s32.totalorder %s32, 0
    %p340 = por %p338, %p339
    %s342 = sadd.s32 %s341, 1
    %p345 = scmp.eq.s32.totalorder %s26, 6
    %p346 = scmp.ne.s32.totalorder %s341, %s343
    %p347 = scmp.eq.s32.totalorder %s26, 0
    %p348 = por %p346, %p347
    %p349 = scmp.ne.s32.totalorder %s341, %s343
    %p350 = scmp.eq.s32.totalorder %s31, 6
    %p351 = por %p349, %p350
    %p352 = scmp.ne.s32.totalorder %s343, %s344
    %p353 = scmp.eq.s32.totalorder %s31, 0
    %p354 = por %p352, %p353
    %p355 = scmp.ne.s32.totalorder %s343, %s344
    %p356 = scmp.eq.s32.totalorder %s32, 6
    %p357 = por %p355, %p356
    %p359 = scmp.ne.s32.totalorder %s344, %s358
    %p360 = scmp.eq.s32.totalorder %s32, 0
    %p361 = por %p359, %p360
    %s363 = sadd.s32 %s362, 1
    %p366 = scmp.eq.s32.totalorder %s26, 6
    %p367 = scmp.ne.s32.totalorder %s362, %s364
    %p368 = scmp.eq.s32.totalorder %s26, 0
    %p369 = por %p367, %p368
    %p370 = scmp.ne.s32.totalorder %s362, %s364
    %p371 = scmp.eq.s32.totalorder %s31, 6
    %p372 = por %p370, %p371
    %p373 = scmp.ne.s32.totalorder %s364, %s365
    %p374 = scmp.eq.s32.totalorder %s31, 0
    %p375 = por %p373, %p374
    %p376 = scmp.ne.s32.totalorder %s364, %s365
    %p377 = scmp.eq.s32.totalorder %s32, 6
    %p378 = por %p376, %p377
    %p380 = scmp.ne.s32.totalorder %s365, %s379
    %p381 = scmp.eq.s32.totalorder %s32, 0
    %p382 = por %p380, %p381
    %s384 = sadd.s32 %s383, 1
    %p387 = scmp.eq.s32.totalorder %s26, 6
    %p388 = scmp.ne.s32.totalorder %s383, %s385
    %p389 = scmp.eq.s32.totalorder %s26, 0
    %p390 = por %p388, %p389
    %p391 = scmp.ne.s32.totalorder %s383, %s385
    %p392 = scmp.eq.s32.totalorder %s31, 6
    %p393 = por %p391, %p392
    %p394 = scmp.ne.s32.totalorder %s385, %s386
    %p395 = scmp.eq.s32.totalorder %s31, 0
    %p396 = por %p394, %p395
    %p397 = scmp.ne.s32.totalorder %s385, %s386
    %p398 = scmp.eq.s32.totalorder %s32, 6
    %p399 = por %p397, %p398
    %p401 = scmp.ne.s32.totalorder %s386, %s400
    %p402 = scmp.eq.s32.totalorder %s32, 0
    %p403 = por %p401, %p402
    %s405 = sadd.s32 %s404, 1
    %p408 = scmp.eq.s32.totalorder %s26, 6
    %p409 = scmp.ne.s32.totalorder %s404, %s406
    %p410 = scmp.eq.s32.totalorder %s26, 0
    %p411 = por %p409, %p410
    %p412 = scmp.ne.s32.totalorder %s404, %s406
    %p413 = scmp.eq.s32.totalorder %s31, 6
    %p414 = por %p412, %p413
    %p415 = scmp.ne.s32.totalorder %s406, %s407
    %p416 = scmp.eq.s32.totalorder %s31, 0
    %p417 = por %p415, %p416
    %p418 = scmp.ne.s32.totalorder %s406, %s407
    %p419 = scmp.eq.s32.totalorder %s32, 6
    %p420 = por %p418, %p419
    %p422 = scmp.ne.s32.totalorder %s407, %s421
    %p423 = scmp.eq.s32.totalorder %s32, 0
    %p424 = por %p422, %p423
    %s426 = sadd.s32 %s425, 1
    %p429 = scmp.eq.s32.totalorder %s26, 6
    %p430 = scmp.ne.s32.totalorder %s425, %s427
    %p431 = scmp.eq.s32.totalorder %s26, 0
    %p432 = por %p430, %p431
    %p433 = scmp.ne.s32.totalorder %s425, %s427
    %p434 = scmp.eq.s32.totalorder %s31, 6
    %p435 = por %p433, %p434
    %p436 = scmp.ne.s32.totalorder %s427, %s428
    %p437 = scmp.eq.s32.totalorder %s31, 0
    %p438 = por %p436, %p437
    %p439 = scmp.ne.s32.totalorder %s427, %s428
    %p440 = scmp.eq.s32.totalorder %s32, 6
    %p441 = por %p439, %p440
    %p443 = scmp.ne.s32.totalorder %s428, %s442
    %p444 = scmp.eq.s32.totalorder %s32, 0
    %p445 = por %p443, %p444
    %s446 = ssub.s32 %s34, %s41
    %s447 = ssub.s32 %s33, %s45
    %s448 = sor.u32 %s446, %s447
    %p449 = scmp.eq.s32.totalorder %s448, 0
    %s451 = sadd.s32 %s450, 1
    %s452 = scalar_select %p449, %s450, %s451
    %p455 = pneg %p449
    %p456 = scmp.eq.s32.totalorder %s26, 6
    %p457 = por %p455, %p456
    %p458 = scmp.ne.s32.totalorder %s450, %s453
    %p459 = scmp.eq.s32.totalorder %s26, 0
    %p460 = por %p458, %p459
    %p461 = scmp.ne.s32.totalorder %s450, %s453
    %p462 = scmp.eq.s32.totalorder %s31, 6
    %p463 = por %p461, %p462
    %p464 = scmp.ne.s32.totalorder %s453, %s454
    %p465 = scmp.eq.s32.totalorder %s31, 0
    %p466 = por %p464, %p465
    %p467 = scmp.ne.s32.totalorder %s453, %s454
    %p468 = scmp.eq.s32.totalorder %s32, 6
    %p469 = por %p467, %p468
    %p471 = scmp.ne.s32.totalorder %s454, %s470
    %p472 = scmp.eq.s32.totalorder %s32, 0
    %p473 = por %p471, %p472
    %p474 = scmp.le.s32.totalorder 1, %s26
    %p475 = scmp.lt.s32.totalorder %s26, 8
    %p476 = pnand %p474, %p475
    %p477 = pneg %p476
    // Predicated region
    $region9: #{_forward_impl.4} parent=5 // pred_check
      _
    $region10: #{_forward_impl.4} parent=5 // pred_check_branch
      %479 = sbr.rel (%p476) target = $region12
    $region11: #{_forward_impl.4} parent=5 // pred_region
      %s480 = ssub.s32 %s26, 1
      // Predicated region
      $region13: #{_forward_impl.4} parent=11 // pred_check
        %p481 = pneg %p92
      $region14: #{_forward_impl.4} parent=11 // pred_check_branch
        %483 = sbr.rel (%p481) target = $region16
      $region15: #{_forward_impl.4} parent=11 // pred_region
        %s484 = smul.u32 2, %s35
        %p485 = scmp.lt.s32.totalorder %s484, 1
        %s486 = scalar_select %p485, %s484, 1
        %s487 = smul.addr %s486, 2
        %s488 = smul.addr %s487, 4
        %s489 = scalar_lea.vmem %s1, %s488
        %s490 = smul.u32 2, %s35
      $region16: #{_forward_impl.4} parent=11 // pred_fallthru
        _
      // Predicated region
      $region17: #{_forward_impl.4} parent=11 // pred_check
        %p491 = pneg %p118
      $region18: #{_forward_impl.4} parent=11 // pred_check_branch
        %493 = sbr.rel (%p491) target = $region20
      $region19: #{_forward_impl.4} parent=11 // pred_region
        %s494 = smul.u32 2, %s35
        %p495 = scmp.lt.s32.totalorder %s494, 1
        %s496 = scalar_select %p495, %s494, 1
        %s497 = smul.addr %s496, 2
        %s498 = smul.addr %s497, 4
        %s499 = scalar_lea.vmem %s2, %s498
        %s500 = smul.u32 2, %s35
      $region20: #{_forward_impl.4} parent=11 // pred_fallthru
        _
      // Predicated region
      $region21: #{_forward_impl.4} parent=11 // pred_check
        %p501 = pneg %p144
      $region22: #{_forward_impl.4} parent=11 // pred_check_branch
        %503 = sbr.rel (%p501) target = $region24
      $region23: #{_forward_impl.4} parent=11 // pred_region
        %p504 = scmp.lt.s32.totalorder %s35, 0
        %s505 = scalar_select %p504, %s35, 0
        %s506 = smul.addr %s505, 2
        %s507 = scalar_lea.vmem %s3, %s506
      $region24: #{_forward_impl.4} parent=11 // pred_fallthru
        _
      // Predicated region
      $region25: #{_forward_impl.4} parent=11 // pred_check
        %p508 = pneg %p165
      $region26: #{_forward_impl.4} parent=11 // pred_check_branch
        %510 = sbr.rel (%p508) target = $region28
      $region27: #{_forward_impl.4} parent=11 // pred_region
        _
      $region28: #{_forward_impl.4} parent=11 // pred_fallthru
        _
      // Predicated region
      $region29: #{_forward_impl.4} parent=11 // pred_check
        %p511 = pneg %p186
      $region30: #{_forward_impl.4} parent=11 // pred_check_branch
        %513 = sbr.rel (%p511) target = $region32
      $region31: #{_forward_impl.4} parent=11 // pred_region
        _
      $region32: #{_forward_impl.4} parent=11 // pred_fallthru
        _
      // Predicated region
      $region33: #{_forward_impl.4} parent=11 // pred_check
        %p514 = pneg %p207
      $region34: #{_forward_impl.4} parent=11 // pred_check_branch
        %516 = sbr.rel (%p514) target = $region36
      $region35: #{_forward_impl.4} parent=11 // pred_region
        _
      $region36: #{_forward_impl.4} parent=11 // pred_fallthru
        _
      // Predicated region
      $region37: #{_forward_impl.4} parent=11 // pred_check
        %p517 = pneg %p228
      $region38: #{_forward_impl.4} parent=11 // pred_check_branch
        %519 = sbr.rel (%p517) target = $region40
      $region39: #{_forward_impl.4} parent=11 // pred_region
        _
      $region40: #{_forward_impl.4} parent=11 // pred_fallthru
        _
      // Predicated region
      $region41: #{_forward_impl.4} parent=11 // pred_check
        %p520 = pneg %p249
      $region42: #{_forward_impl.4} parent=11 // pred_check_branch
        %522 = sbr.rel (%p520) target = $region44
      $region43: #{_forward_impl.4} parent=11 // pred_region
        _
      $region44: #{_forward_impl.4} parent=11 // pred_fallthru
        _
      // Predicated region
      $region45: #{_forward_impl.4} parent=11 // pred_check
        %p523 = pneg %p270
      $region46: #{_forward_impl.4} parent=11 // pred_check_branch
        %525 = sbr.rel (%p523) target = $region48
      $region47: #{_forward_impl.4} parent=11 // pred_region
        _
      $region48: #{_forward_impl.4} parent=11 // pred_fallthru
        _
      // Predicated region
      $region49: #{_forward_impl.4} parent=11 // pred_check
        %p526 = pneg %p291
      $region50: #{_forward_impl.4} parent=11 // pred_check_branch
        %528 = sbr.rel (%p526) target = $region52
      $region51: #{_forward_impl.4} parent=11 // pred_region
        _
      $region52: #{_forward_impl.4} parent=11 // pred_fallthru
        _
      // Predicated region
      $region53: #{_forward_impl.4} parent=11 // pred_check
        %p529 = pneg %p312
      $region54: #{_forward_impl.4} parent=11 // pred_check_branch
        %531 = sbr.rel (%p529) target = $region56
      $region55: #{_forward_impl.4} parent=11 // pred_region
        _
      $region56: #{_forward_impl.4} parent=11 // pred_fallthru
        _
      // Predicated region
      $region57: #{_forward_impl.4} parent=11 // pred_check
        %p532 = pneg %p333
      $region58: #{_forward_impl.4} parent=11 // pred_check_branch
        %534 = sbr.rel (%p532) target = $region60
      $region59: #{_forward_impl.4} parent=11 // pred_region
        _
      $region60: #{_forward_impl.4} parent=11 // pred_fallthru
        _
      // Predicated region
      $region61: #{_forward_impl.4} parent=11 // pred_check
        %p535 = pneg %p354
      $region62: #{_forward_impl.4} parent=11 // pred_check_branch
        %537 = sbr.rel (%p535) target = $region64
      $region63: #{_forward_impl.4} parent=11 // pred_region
        _
      $region64: #{_forward_impl.4} parent=11 // pred_fallthru
        _
      // Predicated region
      $region65: #{_forward_impl.4} parent=11 // pred_check
        %p538 = pneg %p375
      $region66: #{_forward_impl.4} parent=11 // pred_check_branch
        %540 = sbr.rel (%p538) target = $region68
      $region67: #{_forward_impl.4} parent=11 // pred_region
        _
      $region68: #{_forward_impl.4} parent=11 // pred_fallthru
        _
      // Predicated region
      $region69: #{_forward_impl.4} parent=11 // pred_check
        %p541 = pneg %p396
      $region70: #{_forward_impl.4} parent=11 // pred_check_branch
        %543 = sbr.rel (%p541) target = $region72
      $region71: #{_forward_impl.4} parent=11 // pred_region
        _
      $region72: #{_forward_impl.4} parent=11 // pred_fallthru
        _
      // Predicated region
      $region73: #{_forward_impl.4} parent=11 // pred_check
        %p544 = pneg %p417
      $region74: #{_forward_impl.4} parent=11 // pred_check_branch
        %546 = sbr.rel (%p544) target = $region76
      $region75: #{_forward_impl.4} parent=11 // pred_region
        _
      $region76: #{_forward_impl.4} parent=11 // pred_fallthru
        _
      // Predicated region
      $region77: #{_forward_impl.4} parent=11 // pred_check
        %p547 = pneg %p438
      $region78: #{_forward_impl.4} parent=11 // pred_check_branch
        %549 = sbr.rel (%p547) target = $region80
      $region79: #{_forward_impl.4} parent=11 // pred_region
        _
      $region80: #{_forward_impl.4} parent=11 // pred_fallthru
        _
    $region12: #{_forward_impl.4} parent=5 // pred_fallthru
      _
    %p550 = scmp.lt.s32.totalorder %s26, 7
    // Predicated region
    $region81: #{_forward_impl.4} parent=5 // pred_check
      %p551 = pneg %p550
    $region82: #{_forward_impl.4} parent=5 // pred_check_branch
      %553 = sbr.rel (%p551) target = $region84
    $region83: #{_forward_impl.4} parent=5 // pred_region
      // Predicated region
      $region85: #{_forward_impl.4} parent=83 // pred_check
        %p554 = pneg %p60
      $region86: #{_forward_impl.4} parent=83 // pred_check_branch
        %556 = sbr.rel (%p554) target = $region88
      $region87: #{_forward_impl.4} parent=83 // pred_region
        %p557 = scmp.lt.s32.totalorder %s34, 6
        %s558 = scalar_select %p557, %s34, 6
        %p559 = scmp.lt.s32.totalorder %s33, 0
        %s560 = scalar_select %p559, %s33, 0
        %s561 = sadd.s32 %s560, %s558
        %s562 = smul.addr %s561, 2
        %s563 = scalar_lea.vmem %s0, %s562
      $region88: #{_forward_impl.4} parent=83 // pred_fallthru
        _
    $region84: #{_forward_impl.4} parent=5 // pred_fallthru
      _
    %p564 = scmp.le.s32.totalorder 1, %s26
    %p565 = scmp.lt.s32.totalorder %s26, 8
    %p566 = pnand %p564, %p565
    %p567 = pneg %p566
    // Predicated region
    $region89: #{_forward_impl.4} parent=5 // pred_check
      _
    $region90: #{_forward_impl.4} parent=5 // pred_check_branch
      %569 = sbr.rel (%p566) target = $region92
    $region91: #{_forward_impl.4} parent=5 // pred_region
      %s570 = ssub.s32 %s26, 1
      %p571 = scmp.lt.s32.totalorder %s36, 6
      %s572 = scalar_select %p571, %s36, 6
      %p573 = scmp.lt.s32.totalorder %s35, 0
      %s574 = scalar_select %p573, %s35, 0
      %s575 = sadd.s32 %s574, %s572
      %s576 = smul.addr %s575, 2
      %s577 = scalar_lea.vmem %s0, %s576
      %p578 = pneg %p66
      %p579 = pneg %p63
      %s580 = smul.u32 2, %s35
      %p581 = scmp.lt.s32.totalorder %s580, 1
      %s582 = scalar_select %p581, %s580, 1
      %s583 = smul.addr %s582, 2
      %s584 = smul.addr %s583, 4
      %s585 = scalar_lea.vmem %s1, %s584
      %p586 = pneg %p92
      %p587 = pneg %p89
      %s588 = smul.u32 2, %s35
      %p589 = scmp.lt.s32.totalorder %s588, 1
      %s590 = scalar_select %p589, %s588, 1
      %s591 = smul.addr %s590, 2
      %s592 = smul.addr %s591, 4
      %s593 = scalar_lea.vmem %s2, %s592
      %p594 = pneg %p118
      %p595 = pneg %p115
      %p596 = scmp.lt.s32.totalorder %s35, 0
      %s597 = scalar_select %p596, %s35, 0
      %s598 = smul.addr %s597, 2
      %s599 = scalar_lea.vmem %s3, %s598
      %p600 = pneg %p144
      %p601 = pneg %p141
      %p602 = pneg %p165
      %p603 = pneg %p162
      %p604 = pneg %p186
      %p605 = pneg %p183
      %p606 = pneg %p207
      %p607 = pneg %p204
      %p608 = pneg %p228
      %p609 = pneg %p225
      %p610 = pneg %p249
      %p611 = pneg %p246
      %p612 = pneg %p270
      %p613 = pneg %p267
      %p614 = pneg %p291
      %p615 = pneg %p288
      %p616 = pneg %p312
      %p617 = pneg %p309
      %p618 = pneg %p333
      %p619 = pneg %p330
      %p620 = pneg %p354
      %p621 = pneg %p351
      %p622 = pneg %p375
      %p623 = pneg %p372
      %p624 = pneg %p396
      %p625 = pneg %p393
      %p626 = pneg %p417
      %p627 = pneg %p414
      %p628 = pneg %p438
      %p629 = pneg %p435
      %p630 = pneg %p466
      %p631 = pneg %p463
      %p632 = scmp.lt.s32.totalorder %s36, 6
      %s633 = scalar_select %p632, %s36, 6
      %p634 = scmp.lt.s32.totalorder %s35, 0
      %s635 = scalar_select %p634, %s35, 0
      %s636 = sadd.s32 %s635, %s633
      %s637 = scalar_lea.vmem %s18, %s636
      %p638 = scmp.lt.s32.totalorder %s36, 6
      %s639 = scalar_select %p638, %s36, 6
      %p640 = scmp.lt.s32.totalorder %s35, 0
      %s641 = scalar_select %p640, %s35, 0
      %s642 = sadd.s32 %s641, %s639
      %s643 = smul.addr %s642, 2
      %s644 = scalar_lea.vmem %s0, %s643
      %s645 = smul.u32 2, %s35
      %p646 = scmp.lt.s32.totalorder %s645, 1
      %s647 = scalar_select %p646, %s645, 1
      %s648 = smul.addr %s647, 2
      %s649 = smul.addr %s648, 4
      %s650 = scalar_lea.vmem %s1, %s649
      %s651 = smul.u32 2, %s35
      %s652 = smul.u32 2, %s35
      %p653 = scmp.lt.s32.totalorder %s652, 1
      %s654 = scalar_select %p653, %s652, 1
      %s655 = smul.addr %s654, 2
      %s656 = smul.addr %s655, 4
      %s657 = scalar_lea.vmem %s2, %s656
      %s658 = smul.u32 2, %s35
      %p659 = scmp.lt.s32.totalorder %s35, 0
      %s660 = scalar_select %p659, %s35, 0
      %s661 = smul.addr %s660, 2
      %s662 = scalar_lea.vmem %s3, %s661
      %p663 = scmp.lt.s32.totalorder %s36, 6
      %s664 = scalar_select %p663, %s36, 6
      %p665 = scmp.lt.s32.totalorder %s35, 0
      %s666 = scalar_select %p665, %s35, 0
      %s667 = sadd.s32 %s666, %s664
      %s668 = scalar_lea.vmem %s18, %s667
      %p670 = scmp.eq.s32.totalorder %s36, 0
      // Predicated region
      $region93: #{_forward_impl.4} parent=91 // pred_check
        %p671 = pneg %p670
      $region94: #{_forward_impl.4} parent=91 // pred_check_branch
        %673 = sbr.rel (%p671) target = $region96
      $region95: #{_forward_impl.4} parent=91 // pred_region
        %vm674 = vcmask 254976
        %675 = vst.msk [vmem:[#allocation2] sm:$0x3] %vm674, 0.0
        %676 = vst.msk [vmem:[#allocation3] sm:$0x3] %vm674, 0.0
      $region96: #{_forward_impl.4} parent=91 // pred_fallthru
        _
      %v677 = vld [vmem:[%s644] sm:$0x3]
      %v678 = vld [vmem:[%s662] sm:$0x3]
      %v679 = vld [vmem:[#allocation2] sm:$0x3]
      %v680 = vld [vmem:[#allocation3] sm:$0x3]
      %682 = vrot.lane.b32.xlu0 %v679, 32
      %v683 = vpop.permute.xlu0 %682
      %686 = vrot.lane.b32.xlu0 %v678, 64
      %v687 = vpop.permute.xlu0 %686
      %vm689 = vcmask 261120
      %v690 = vsel %vm689, %v677, %v683
      %vm691 = vcmask 523264
      %v692 = vsel %vm691, %v690, %v687
      %v693 = vpack.c.bf16 %v692, %v692
      %v694 = vld [vmem:[%s4] sm:$0xff]
      %v695 = vld [vmem:[%s4 + $0x8] sm:$0xff]
      %v696 = vld [vmem:[%s4 + $0x10] sm:$0xff]
      %v697 = vld [vmem:[%s4 + $0x18] sm:$0xff]
      %v698 = vld [vmem:[%s4 + $0x20] sm:$0xff]
      %v699 = vld [vmem:[%s4 + $0x28] sm:$0xff]
      %v700 = vld [vmem:[%s4 + $0x30] sm:$0xff]
      %v701 = vld [vmem:[%s4 + $0x38] sm:$0xff]
      %v702 = vld [vmem:[%s4 + $0x40] sm:$0xff]
      %v703 = vld [vmem:[%s4 + $0x48] sm:$0xff]
      %v704 = vld [vmem:[%s4 + $0x50] sm:$0xff]
      %v705 = vld [vmem:[%s4 + $0x58] sm:$0xff]
      %v706 = vld [vmem:[%s5] sm:$0x3]
      %v708 = vperm.slane %v706, 0
      %v709 = vperm.slane %v706, 1
      %v724 = vunpack.c.l.b16 %v694
      %v725 = vunpack.c.h.b16 %v694
      %v726 = vunpack.c.l.b16 %v695
      %v727 = vunpack.c.h.b16 %v695
      %v728 = vunpack.c.l.b16 %v696
      %v729 = vunpack.c.h.b16 %v696
      %v730 = vunpack.c.l.b16 %v697
      %v731 = vunpack.c.h.b16 %v697
      %v732 = vunpack.c.l.b16 %v698
      %v733 = vunpack.c.h.b16 %v698
      %v734 = vunpack.c.l.b16 %v699
      %v735 = vunpack.c.h.b16 %v699
      %v736 = vunpack.c.l.b16 %v700
      %v737 = vunpack.c.h.b16 %v700
      %v738 = vunpack.c.l.b16 %v701
      %v739 = vunpack.c.h.b16 %v701
      %v740 = vunpack.c.l.b16 %v702
      %v741 = vunpack.c.h.b16 %v702
      %v742 = vunpack.c.l.b16 %v703
      %v743 = vunpack.c.h.b16 %v703
      %v744 = vunpack.c.l.b16 %v704
      %v745 = vunpack.c.h.b16 %v704
      %v746 = vunpack.c.l.b16 %v705
      %v747 = vunpack.c.h.b16 %v705
      %v748 = vpack.c.b16 %v726, %v724
      %v749 = vpack.c.b16 %v727, %v725
      %v750 = vpack.c.b16 %v730, %v728
      %v751 = vpack.c.b16 %v731, %v729
      %v752 = vpack.c.b16 %v734, %v732
      %v753 = vpack.c.b16 %v735, %v733
      %v754 = vpack.c.b16 %v738, %v736
      %v755 = vpack.c.b16 %v739, %v737
      %v756 = vpack.c.b16 %v742, %v740
      %v757 = vpack.c.b16 %v743, %v741
      %v758 = vpack.c.b16 %v746, %v744
      %v759 = vpack.c.b16 %v747, %v745
      %vm772 = vcmask 785408
      %v774 = vsel %vm772, %v693, 0
      %776 = vmatpush.bf16.msra.mxu0 0
      %777 = vmatpush.bf16.msra.mxu0 0
      %778 = vmatpush.bf16.msra.mxu0 %v758
      %779 = vmatpush.bf16.msra.mxu0 %v756
      %780 = vmatpush.bf16.msra.mxu0 %v754
      %781 = vmatpush.bf16.msra.mxu0 %v752
      %782 = vmatpush.bf16.msra.mxu0 %v750
      %783 = vmatpush.bf16.msra.mxu0 %v748
      %784 = vmatmul.bf16.gmra.mxu0 %v774
      %v785 = vpop.f32.mrf.mxu0
      %v786 = vadd.f32 %v708, %v785
      %v787 = vpop.f32.mrf.mxu0
      %788 = vdwg.mxu0
      %789 = vmatpush.bf16.msra.mxu0 0
      %790 = vmatpush.bf16.msra.mxu0 0
      %791 = vmatpush.bf16.msra.mxu0 %v759
      %792 = vmatpush.bf16.msra.mxu0 %v757
      %793 = vmatpush.bf16.msra.mxu0 %v755
      %794 = vmatpush.bf16.msra.mxu0 %v753
      %795 = vmatpush.bf16.msra.mxu0 %v751
      %796 = vmatpush.bf16.msra.mxu0 %v749
      %797 = vmatmul.bf16.gmra.mxu0 %v774
      %v798 = vpop.f32.mrf.mxu0
      %v799 = vadd.f32 %v709, %v798
      %v800 = vpop.f32.mrf.mxu0
      %801 = vdwg.mxu0
      %v802 = vxor.u32 %v786, 2147483648
      %v803 = vmul.f32 %v802, 1.442695
      %v804 = vpow.pop %v803
      %v805 = vadd.f32 %v804, 1.0
      %v806 = vrcp.pop %v805
      %v807 = vmul.f32 %v805, %v806
      %v808 = vsub.f32 1.0, %v807
      %v809 = vmul.f32 %v806, %v808
      %v810 = vadd.f32 %v806, %v809
      %vm811 = vweird.f32 %v805
      %vm812 = vweird.f32 %v806
      %vm813 = vmor %vm811, %vm812
      %v814 = vsel %vm813, %v806, %v810
      %v815 = vand.u32 2147483647, %v805
      %vm816 = vcmp.eq.f32.partialorder %v815, 8.507059e+37
      %v817 = vand.u32 %v805, 2147483648
      %v818 = vor.u32 1.1754944e-38, %v817
      %v819 = vsel %vm816, %v818, %v814
      %v820 = vmul.f32 1.0, %v819
      %822 = vrot.lane.b32.xlu0 %v799, 96
      %v823 = vpop.permute.xlu0 %822
      %v825 = vmax.f32 %v799, %v823
      %827 = vrot.lane.b32.xlu0 %v680, 32
      %v828 = vpop.permute.xlu0 %827
      %v830 = vmul.f32 %v820, %v828
      %v831 = vmul.f32 %v820, %v825
      %833 = vrot.lane.b32.xlu0 %v831, 32
      %v834 = vpop.permute.xlu0 %833
      %v836 = vadd.f32 %v830, %v834
      %v837 = vtanh.pop %v836
      %839 = vrot.lane.b32.xlu0 %v837, 64
      %v840 = vpop.permute.xlu0 %839
      %v842 = vmul.f32 %v820, %v840
      %843 = vrot.lane.b32.xlu0 %v837, 32
      %v844 = vpop.permute.xlu0 %843
      %v846 = vmul.f32 %v820, %v844
      %848 = vrot.lane.b32.xlu0 %v846, 64
      %v849 = vpop.permute.xlu0 %848
      %vm851 = vcmask 254976
      %852 = vst.msk [vmem:[#allocation2] sm:$0x3] %vm851, %v849
      %853 = vrot.lane.b32.xlu0 %v837, 96
      %v854 = vpop.permute.xlu0 %853
      %856 = vst.msk [vmem:[#allocation3] sm:$0x3] %vm851, %v854
      %v857 = vpack.c.bf16 %v842, %v842
      %v858 = vld [vmem:[%s6] sm:$0xf]
      %v859 = vld [vmem:[%s6 + $0x4] sm:$0xf]
      %v860 = vld [vmem:[%s6 + $0x8] sm:$0xf]
      %v861 = vld [vmem:[%s6 + $0xc] sm:$0xf]
      %v862 = vld [vmem:[%s7] sm:$0x1]
      %v864 = vperm.slane %v862, 0
      %867 = vrot.lane.b32.xlu0 %v857, 32
      %v868 = vpop.permute.xlu0 %867
      %v873 = vunpack.c.l.b16 %v858
      %v874 = vunpack.c.l.b16 %v859
      %v875 = vunpack.c.l.b16 %v860
      %v876 = vunpack.c.l.b16 %v861
      %v877 = vpack.c.b16 %v874, %v873
      %v878 = vpack.c.b16 %v876, %v875
      %v882 = vsel %vm689, %v868, 0
      %884 = vmatpush.bf16.msra.mxu0 0
      %885 = vmatpush.bf16.msra.mxu0 0
      %886 = vmatpush.bf16.msra.mxu0 0
      %887 = vmatpush.bf16.msra.mxu0 0
      %888 = vmatpush.bf16.msra.mxu0 0
      %889 = vmatpush.bf16.msra.mxu0 0
      %890 = vmatpush.bf16.msra.mxu0 %v878
      %891 = vmatpush.bf16.msra.mxu0 %v877
      %892 = vmatmul.bf16.gmra.mxu0 %v882
      %v893 = vpop.f32.mrf.mxu0
      %v894 = vadd.f32 %v864, %v893
      %v895 = vpop.f32.mrf.mxu0
      %896 = vdwg.mxu0
      %v897 = vmax.f32 %v894, 0.0
      %v898 = vpack.c.bf16 %v897, %v897
      %v899 = vld [vmem:[%s8] sm:$0xf]
      %v900 = vld [vmem:[%s8 + $0x4] sm:$0xf]
      %v901 = vld [vmem:[%s8 + $0x8] sm:$0xf]
      %v902 = vld [vmem:[%s8 + $0xc] sm:$0xf]
      %v903 = vld [vmem:[%s9] sm:$0x1]
      %v905 = vperm.slane %v903, 0
      %v911 = vunpack.c.l.b16 %v899
      %v912 = vunpack.c.l.b16 %v900
      %v913 = vunpack.c.l.b16 %v901
      %v914 = vunpack.c.l.b16 %v902
      %v915 = vpack.c.b16 %v912, %v911
      %v916 = vpack.c.b16 %v914, %v913
      %v920 = vsel %vm689, %v898, 0
      %922 = vmatpush.bf16.msra.mxu0 0
      %923 = vmatpush.bf16.msra.mxu0 0
      %924 = vmatpush.bf16.msra.mxu0 0
      %925 = vmatpush.bf16.msra.mxu0 0
      %926 = vmatpush.bf16.msra.mxu0 0
      %927 = vmatpush.bf16.msra.mxu0 0
      %928 = vmatpush.bf16.msra.mxu0 %v916
      %929 = vmatpush.bf16.msra.mxu0 %v915
      %930 = vmatmul.bf16.gmra.mxu0 %v920
      %v931 = vpop.f32.mrf.mxu0
      %v932 = vadd.f32 %v905, %v931
      %v933 = vpop.f32.mrf.mxu0
      %934 = vdwg.mxu0
      %v935 = vpack.c.bf16 %v846, %v846
      %v936 = vld [vmem:[%s10] sm:$0xf]
      %v937 = vld [vmem:[%s10 + $0x4] sm:$0xf]
      %v938 = vld [vmem:[%s10 + $0x8] sm:$0xf]
      %v939 = vld [vmem:[%s10 + $0xc] sm:$0xf]
      %v940 = vld [vmem:[%s11] sm:$0x1]
      %v942 = vperm.slane %v940, 0
      %945 = vrot.lane.b32.xlu0 %v935, 64
      %v946 = vpop.permute.xlu0 %945
      %v951 = vunpack.c.l.b16 %v936
      %v952 = vunpack.c.l.b16 %v937
      %v953 = vunpack.c.l.b16 %v938
      %v954 = vunpack.c.l.b16 %v939
      %v955 = vpack.c.b16 %v952, %v951
      %v956 = vpack.c.b16 %v954, %v953
      %v960 = vsel %vm689, %v946, 0
      %962 = vmatpush.bf16.msra.mxu0 0
      %963 = vmatpush.bf16.msra.mxu0 0
      %964 = vmatpush.bf16.msra.mxu0 0
      %965 = vmatpush.bf16.msra.mxu0 0
      %966 = vmatpush.bf16.msra.mxu0 0
      %967 = vmatpush.bf16.msra.mxu0 0
      %968 = vmatpush.bf16.msra.mxu0 %v956
      %969 = vmatpush.bf16.msra.mxu0 %v955
      %970 = vmatmul.bf16.gmra.mxu0 %v960
      %v971 = vpop.f32.mrf.mxu0
      %v972 = vadd.f32 %v942, %v971
      %v973 = vpop.f32.mrf.mxu0
      %974 = vdwg.mxu0
      %v975 = vtanh.pop %v972
      %v976 = vpack.c.bf16 %v975, %v975
      %v977 = vld [vmem:[%s12] sm:$0xf]
      %v978 = vld [vmem:[%s12 + $0x4] sm:$0xf]
      %v979 = vld [vmem:[%s12 + $0x8] sm:$0xf]
      %v980 = vld [vmem:[%s12 + $0xc] sm:$0xf]
      %v981 = vld [vmem:[%s13] sm:$0x1]
      %v983 = vperm.slane %v981, 0
      %v989 = vunpack.c.l.b16 %v977
      %v990 = vunpack.c.l.b16 %v978
      %v991 = vunpack.c.l.b16 %v979
      %v992 = vunpack.c.l.b16 %v980
      %v993 = vpack.c.b16 %v990, %v989
      %v994 = vpack.c.b16 %v992, %v991
      %v998 = vsel %vm689, %v976, 0
      %1000 = vmatpush.bf16.msra.mxu0 0
      %1001 = vmatpush.bf16.msra.mxu0 0
      %1002 = vmatpush.bf16.msra.mxu0 0
      %1003 = vmatpush.bf16.msra.mxu0 0
      %1004 = vmatpush.bf16.msra.mxu0 0
      %1005 = vmatpush.bf16.msra.mxu0 0
      %1006 = vmatpush.bf16.msra.mxu0 %v994
      %1007 = vmatpush.bf16.msra.mxu0 %v993
      %1008 = vmatmul.bf16.gmra.mxu0 %v998
      %v1009 = vpop.f32.mrf.mxu0
      %v1010 = vadd.f32 %v983, %v1009
      %v1011 = vpop.f32.mrf.mxu0
      %1012 = vdwg.mxu0
      %v1013 = vadd.f32 %v932, %v1010
      %v1014 = vtanh.pop %v1013
      %v1015 = vld [vmem:[%s657] sm:$0xf]
      %v1016 = vld [vmem:[%s657 + $0x4] sm:$0xf]
      %v1017 = vld [vmem:[%s657 + $0x8] sm:$0xf]
      %v1018 = vld [vmem:[%s657 + $0xc] sm:$0xf]
      %v1019 = vunpack.c.l.bf16 %v1015
      %v1020 = vunpack.c.l.bf16 %v1016
      %v1021 = vunpack.c.l.bf16 %v1017
      %v1022 = vunpack.c.l.bf16 %v1018
      %v1024 = vrot.slane %v1010, 1
      %v1025 = vperm.slane %v1010, 0
      %v1026 = vperm.slane %v1024, 0
      %v1029 = vadd.f32 %v1019, %v1025
      %v1030 = vadd.f32 %v1020, %v1025
      %v1031 = vadd.f32 %v1021, %v1026
      %v1032 = vadd.f32 %v1022, %v1026
      %v1033 = vtanh.pop %v1029
      %v1034 = vtanh.pop %v1030
      %v1035 = vtanh.pop %v1031
      %v1036 = vtanh.pop %v1032
      %v1037 = vld [vmem:[%s14] sm:$0x1]
      %v1038 = vld [vmem:[#allocation4] sm:$0x1]
      %v1040 = vperm.slane %v1037, 0
      %v1042 = vmul.f32 %v1014, %v1040
      %v1043 = vsel %vm851, %v1042, 0.0
      %1044 = vadd.xlane.f32.xlu0 %v1043
      %v1045 = vpop.xlane.xlu0 %1044
      %v1047 = vperm.slane %v1038, 0
      %v1049 = vadd.f32 %v1045, %v1047
      %v1050 = vmul.f32 %v1033, %v1040
      %v1051 = vmul.f32 %v1034, %v1040
      %v1052 = vmul.f32 %v1035, %v1040
      %v1053 = vmul.f32 %v1036, %v1040
      %v1054 = vsel %vm689, %v1050, 0.0
      %1055 = vadd.xlane.f32.xlu0 %v1054
      %v1056 = vpop.xlane.xlu0 %1055
      %v1057 = vsel %vm689, %v1051, 0.0
      %1058 = vadd.xlane.f32.xlu0 %v1057
      %v1059 = vpop.xlane.xlu0 %1058
      %v1060 = vsel %vm689, %v1052, 0.0
      %1061 = vadd.xlane.f32.xlu0 %v1060
      %v1062 = vpop.xlane.xlu0 %1061
      %v1063 = vsel %vm689, %v1053, 0.0
      %1064 = vadd.xlane.f32.xlu0 %v1063
      %v1065 = vpop.xlane.xlu0 %1064
      %1066 = vset.pattern.permute.xlu0 0
      %1067 = vperm.xlu0 %1066, %v1047
      %v1068 = vpop.permute.xlu0 %1067
      %v1070 = vadd.f32 %v1056, %v1068
      %v1071 = vadd.f32 %v1059, %v1068
      %v1072 = vadd.f32 %v1062, %v1068
      %v1073 = vadd.f32 %v1065, %v1068
      %v1078 = vlaneseq
      %v1079 = vand.u32 %v1078, 127
      %v1080 = vperm.slane %v1070, %v1079
      %v1081 = vadd.s32 %v1079, 4294967288
      %v1082 = vperm.slane %v1071, %v1081
      %vm1083 = vcmask 130112
      %v1084 = vsel %vm1083, %v1082, %v1080
      %v1085 = vperm.slane %v1072, %v1079
      %v1086 = vperm.slane %v1073, %v1081
      %v1087 = vsel %vm1083, %v1086, %v1085
      %vm1088 = vcmask 1041409
      %v1089 = vsel %vm1088, %v1087, %v1084
      %vm1091 = vcmask 123904
      %v1092 = vsel %vm1091, %v1089, -inf
      %1093 = vmax.xlane.f32.xlu0 %v1092
      %v1094 = vpop.xlane.xlu0 %1093
      %v1095 = vmax.f32 %v1094, %v1049
      %v1096 = vsub.f32 %v1049, %v1095
      %v1097 = vmul.f32 %v1096, 1.442695
      %v1098 = vpow.pop %v1097
      %1100 = vset.pattern.permute.xlu0 0
      %1101 = vperm.xlu0 %1100, %v1095
      %v1102 = vpop.permute.xlu0 %1101
      %v1103 = vperm.slane %v1102, 0
      %v1104 = vperm.slane %v1102, 1
      %v1107 = vsub.f32 %v1070, %v1103
      %v1108 = vsub.f32 %v1071, %v1103
      %v1109 = vsub.f32 %v1072, %v1104
      %v1110 = vsub.f32 %v1073, %v1104
      %v1111 = vmul.f32 %v1107, 1.442695
      %v1112 = vpow.pop %v1111
      %v1113 = vmul.f32 %v1108, 1.442695
      %v1114 = vpow.pop %v1113
      %v1115 = vmul.f32 %v1109, 1.442695
      %v1116 = vpow.pop %v1115
      %v1117 = vmul.f32 %v1110, 1.442695
      %v1118 = vpow.pop %v1117
      %1123 = vset.pattern.permute.xlu0 0
      %1124 = vperm.xlu0 %1123, %v1112
      %v1125 = vpop.permute.xlu0 %1124
      %1126 = vset.pattern.permute.xlu0 0
      %1127 = vperm.xlu0 %1126, %v1114
      %v1128 = vpop.permute.xlu0 %1127
      %1129 = vset.pattern.permute.xlu0 0
      %1130 = vperm.xlu0 %1129, %v1116
      %v1131 = vpop.permute.xlu0 %1130
      %1132 = vset.pattern.permute.xlu0 0
      %1133 = vperm.xlu0 %1132, %v1118
      %v1134 = vpop.permute.xlu0 %1133
      %v1135 = vperm.slane %v1125, %v1079
      %v1136 = vperm.slane %v1128, %v1081
      %v1137 = vsel %vm1083, %v1136, %v1135
      %v1138 = vperm.slane %v1131, %v1079
      %v1139 = vperm.slane %v1134, %v1081
      %v1140 = vsel %vm1083, %v1139, %v1138
      %v1141 = vsel %vm1088, %v1140, %v1137
      %v1143 = vsel %vm1091, %v1141, 0.0
      %1144 = vadd.xlane.f32.xlu0 %v1143
      %v1145 = vpop.xlane.xlu0 %1144
      %v1146 = vadd.f32 %v1098, %v1145
      %v1147 = vrcp.pop %v1146
      %v1148 = vmul.f32 %v1098, %v1147
      %1150 = vset.pattern.permute.xlu0 0
      %1151 = vperm.xlu0 %1150, %v1147
      %v1152 = vpop.permute.xlu0 %1151
      %v1153 = vperm.slane %v1152, 0
      %v1154 = vperm.slane %v1152, 1
      %v1157 = vmul.f32 %v1112, %v1153
      %v1158 = vmul.f32 %v1114, %v1153
      %v1159 = vmul.f32 %v1116, %v1154
      %v1160 = vmul.f32 %v1118, %v1154
      %v1161 = vpack.c.bf16 %v1157, %v1157
      %v1162 = vpack.c.bf16 %v1158, %v1158
      %v1163 = vpack.c.bf16 %v1159, %v1159
      %v1164 = vpack.c.bf16 %v1160, %v1160
      %v1165 = vld [vmem:[%s650] sm:$0xf]
      %v1166 = vld [vmem:[%s650 + $0x4] sm:$0xf]
      %v1167 = vld [vmem:[%s650 + $0x8] sm:$0xf]
      %v1168 = vld [vmem:[%s650 + $0xc] sm:$0xf]
      %v1171 = vunpack.c.l.b16 %v1161
      %v1172 = vunpack.c.l.b16 %v1162
      %v1173 = vpack.c.b16 %v1172, %v1171
      %v1174 = vunpack.c.l.b16 %v1173
      %v1175 = vunpack.c.h.b16 %v1173
      %1176 = vset.pattern.permute.xlu0 0
      %1177 = vperm.xlu0 %1176, %v1174
      %v1178 = vpop.permute.xlu0 %1177
      %1179 = vset.pattern.permute.xlu0 0
      %1180 = vperm.xlu0 %1179, %v1175
      %v1181 = vpop.permute.xlu0 %1180
      %v1182 = vperm.slane %v1178, %v1079
      %v1183 = vperm.slane %v1181, %v1081
      %v1184 = vsel %vm1083, %v1183, %v1182
      %v1185 = vpack.c.b16 %v1184, %v1184
      %v1188 = vunpack.c.l.b16 %v1165
      %v1189 = vunpack.c.l.b16 %v1166
      %v1190 = vpack.c.b16 %v1189, %v1188
      %vm1192 = vcmask 130048
      %v1194 = vsel %vm1192, %v1185, 0
      %1196 = vmatpush.bf16.msra.mxu0 0
      %1197 = vmatpush.bf16.msra.mxu0 0
      %1198 = vmatpush.bf16.msra.mxu0 0
      %1199 = vmatpush.bf16.msra.mxu0 0
      %1200 = vmatpush.bf16.msra.mxu0 0
      %1201 = vmatpush.bf16.msra.mxu0 0
      %1202 = vmatpush.bf16.msra.mxu0 0
      %1203 = vmatpush.bf16.msra.mxu0 %v1190
      %1204 = vmatmul.bf16.gmra.mxu0 %v1194
      %v1205 = vpop.f32.mrf.mxu0
      %v1206 = vadd.f32 0.0, %v1205
      %v1207 = vpop.f32.mrf.mxu0
      %1208 = vdwg.mxu0
      %v1211 = vunpack.c.l.b16 %v1163
      %v1212 = vunpack.c.l.b16 %v1164
      %v1213 = vpack.c.b16 %v1212, %v1211
      %v1214 = vunpack.c.l.b16 %v1213
      %v1215 = vunpack.c.h.b16 %v1213
      %1216 = vset.pattern.permute.xlu0 0
      %1217 = vperm.xlu0 %1216, %v1214
      %v1218 = vpop.permute.xlu0 %1217
      %1219 = vset.pattern.permute.xlu0 0
      %1220 = vperm.xlu0 %1219, %v1215
      %v1221 = vpop.permute.xlu0 %1220
      %v1222 = vperm.slane %v1218, %v1079
      %v1223 = vperm.slane %v1221, %v1081
      %v1224 = vsel %vm1083, %v1223, %v1222
      %v1225 = vpack.c.b16 %v1224, %v1224
      %v1228 = vunpack.c.l.b16 %v1167
      %v1229 = vunpack.c.l.b16 %v1168
      %v1230 = vpack.c.b16 %v1229, %v1228
      %v1233 = vsel %vm1192, %v1225, 0
      %1235 = vmatpush.bf16.msra.mxu0 0
      %1236 = vmatpush.bf16.msra.mxu0 0
      %1237 = vmatpush.bf16.msra.mxu0 0
      %1238 = vmatpush.bf16.msra.mxu0 0
      %1239 = vmatpush.bf16.msra.mxu0 0
      %1240 = vmatpush.bf16.msra.mxu0 0
      %1241 = vmatpush.bf16.msra.mxu0 0
      %1242 = vmatpush.bf16.msra.mxu0 %v1230
      %1243 = vmatmul.bf16.gmra.mxu0 %v1233
      %v1244 = vpop.f32.mrf.mxu0
      %v1245 = vadd.f32 0.0, %v1244
      %v1246 = vpop.f32.mrf.mxu0
      %1247 = vdwg.mxu0
      %1249 = vset.pattern.permute.xlu0 0
      %1250 = vperm.xlu0 %1249, %v1148
      %v1251 = vpop.permute.xlu0 %1250
      %v1253 = vmul.f32 %v1251, %v897
      %v1256 = vrot.slane %v1245, 7
      %v1257 = vsel %vm1088, %v1256, %v1206
      %v1259 = vadd.f32 %v1253, %v1257
      %v1260 = vadd.f32 %v1259, %v975
      %v1261 = vpack.c.bf16 %v1260, %v1260
      %v1262 = vld [vmem:[%s16] sm:$0xf]
      %v1263 = vld [vmem:[%s16 + $0x4] sm:$0xf]
      %v1264 = vld [vmem:[%s16 + $0x8] sm:$0xf]
      %v1265 = vld [vmem:[%s16 + $0xc] sm:$0xf]
      %v1266 = vld [vmem:[%s17] sm:$0x1]
      %v1268 = vperm.slane %v1266, 0
      %v1274 = vunpack.c.l.b16 %v1262
      %v1275 = vunpack.c.l.b16 %v1263
      %v1276 = vunpack.c.l.b16 %v1264
      %v1277 = vunpack.c.l.b16 %v1265
      %v1278 = vpack.c.b16 %v1275, %v1274
      %v1279 = vpack.c.b16 %v1277, %v1276
      %v1283 = vsel %vm689, %v1261, 0
      %1285 = vmatpush.bf16.msra.mxu0 0
      %1286 = vmatpush.bf16.msra.mxu0 0
      %1287 = vmatpush.bf16.msra.mxu0 0
      %1288 = vmatpush.bf16.msra.mxu0 0
      %1289 = vmatpush.bf16.msra.mxu0 0
      %1290 = vmatpush.bf16.msra.mxu0 0
      %1291 = vmatpush.bf16.msra.mxu0 %v1279
      %1292 = vmatpush.bf16.msra.mxu0 %v1278
      %1293 = vmatmul.bf16.gmra.mxu0 %v1283
      %v1294 = vpop.f32.mrf.mxu0
      %v1295 = vadd.f32 %v1268, %v1294
      %v1296 = vpop.f32.mrf.mxu0
      %1297 = vdwg.mxu0
      %v1298 = vtanh.pop %v1295
      %v1299 = vpack.c.bf16 %v1298, %v1298
      %vm1300 = vcmask 253952
      %1301 = vst.msk [vmem:[%s668] sm:$0x1] %vm1300, %v1299
      %p1302 = scmp.lt.s32.totalorder %s36, 6
      %s1303 = scalar_select %p1302, %s36, 6
      %p1304 = scmp.lt.s32.totalorder %s35, 0
      %s1305 = scalar_select %p1304, %s35, 0
      %s1306 = sadd.s32 %s1305, %s1303
      %s1307 = scalar_lea.vmem %s18, %s1306
      // Predicated region
      $region97: #{_forward_impl.4} parent=91 // pred_check
        %p1308 = pneg %p463
      $region98: #{_forward_impl.4} parent=91 // pred_check_branch
        %1310 = sbr.rel (%p1308) target = $region100
      $region99: #{_forward_impl.4} parent=91 // pred_region
        _
      $region100: #{_forward_impl.4} parent=91 // pred_fallthru
        _
    $region92: #{_forward_impl.4} parent=5 // pred_fallthru
      _
    %p1311 = scmp.le.s32.totalorder 2, %s26
    // Predicated region
    $region101: #{_forward_impl.4} parent=5 // pred_check
      %p1312 = pneg %p1311
    $region102: #{_forward_impl.4} parent=5 // pred_check_branch
      %1314 = sbr.rel (%p1312) target = $region104
    $region103: #{_forward_impl.4} parent=5 // pred_region
      %s1315 = ssub.s32 %s26, 2
      // Predicated region
      $region105: #{_forward_impl.4} parent=103 // pred_check
        %p1316 = pneg %p469
      $region106: #{_forward_impl.4} parent=103 // pred_check_branch
        %1318 = sbr.rel (%p1316) target = $region108
      $region107: #{_forward_impl.4} parent=103 // pred_region
        %p1319 = scmp.lt.s32.totalorder %s38, 6
        %s1320 = scalar_select %p1319, %s38, 6
        %p1321 = scmp.lt.s32.totalorder %s37, 0
        %s1322 = scalar_select %p1321, %s37, 0
        %s1323 = sadd.s32 %s1322, %s1320
        %s1324 = scalar_lea.vmem %s18, %s1323
      $region108: #{_forward_impl.4} parent=103 // pred_fallthru
        _
    $region104: #{_forward_impl.4} parent=5 // pred_fallthru
      _
  $region6: #{_forward_impl.4} parent=0 // loop_footer
    %s30 = sadd.s32 1, %s26
  $region7: #{_forward_impl.4} parent=0 // loop_footer_branch
    %25 = sbr.rel target = $region3
  $region8: #{_forward_impl.4} parent=0 // loop_exit
    _

</llo_original>
